<compile_context>
chip_gen: v7x
topology: tpu7x:2x2x1
jax: 0.10.0
libtpu: 0.0.40
codegen_flags: <defaults>
</compile_context>

<pallas_src>
import functools

import jax
import jax.numpy as jnp
from jax.experimental import pallas as pl
from jax.experimental.pallas import tpu as pltpu


def _round_up(x, m):
    return (x + m - 1) // m * m


def _lstm_mlp_kernel(x_ref, wih_ref, whh_ref, bias_ref, fcw_ref, out_ref, xg_scr):
    """Single-program kernel: whole (tiny) problem lives in VMEM.

    x_ref   : (S*Bp, Ep)        bf16, time-major, batch/embedding-padded input (flattened)
    wih_ref : (Ep, 4Hp)         bf16, input-to-hidden weights (g-gate cols pre-scaled x2)
    whh_ref : (Hp, 4Hp)         bf16, hidden-to-hidden weights (g-gate cols pre-scaled x2)
    bias_ref: (1, 4Hp+128+Cp)   f32, packed [lstm bias (g x2) | fc1_b | fc2_b]
    fcw_ref : (128, 128+Cp)     bf16, packed [fc1_w | fc2_w]
    out_ref : (Bp, Cp)          f32 logits (lane-dense; wrapper slices to (B, C))
    xg_scr  : (S, Bp, 4Hp)      f32 scratch: precomputed input projection (+bias), all steps
    """
    S, Bp, G = xg_scr.shape
    Hp = G // 4
    F1 = 128

    # (1) Hoisted input projection + LSTM bias: one MXU-friendly bf16 matmul over all
    #     timesteps, off the serial critical path.
    xg = jnp.dot(x_ref[...], wih_ref[...],
                 preferred_element_type=jnp.float32) + bias_ref[:, :G]
    xg_scr[...] = xg.reshape(S, Bp, G)

    # (2) Recurrence: h/c carried in registers (each one (8,128) f32 vreg), fully unrolled
    #     (S is small & static). Per step: one bf16 MXU push, one merged sigmoid EUP call,
    #     one tanh, and a handful of VPU fmas.
    h = jnp.zeros((Bp, Hp), jnp.float32)
    c = jnp.zeros((Bp, Hp), jnp.float32)
    for t in range(S):
        gates = jnp.dot(h.astype(jnp.bfloat16), whh_ref[...],
                        preferred_element_type=jnp.float32) + xg_scr[t]      # (Bp, 4Hp) f32
        s = jax.nn.sigmoid(gates)                    # ONE EUP call over all four gates
        i_g = s[:, 0 * Hp:1 * Hp]
        f_g = s[:, 1 * Hp:2 * Hp]
        g_g = 2.0 * s[:, 2 * Hp:3 * Hp] - 1.0        # tanh(z) == 2*sigmoid(2z) - 1 (z pre-scaled)
        o_g = s[:, 3 * Hp:4 * Hp]
        c = f_g * c + i_g * g_g
        h = o_g * jnp.tanh(c)

    # (3) MLP head on the final hidden state: ReLU(h @ W1 + b1) @ W2 + b2, bf16 MXU, f32 acc.
    fc1_b = bias_ref[:, G:G + F1]
    fc2_b = bias_ref[:, G + F1:]
    z1 = jnp.dot(h.astype(jnp.bfloat16), fcw_ref[:, :F1],
                 preferred_element_type=jnp.float32) + fc1_b
    z1 = jnp.maximum(z1, 0.0)
    logits = jnp.dot(z1.astype(jnp.bfloat16), fcw_ref[:, F1:],
                     preferred_element_type=jnp.float32) + fc2_b
    out_ref[...] = logits.astype(out_ref.dtype)


def prepare_params(params):
    """One-time weight preparation (call OUTSIDE the per-step forward path).

    Zero-pads so each LSTM gate occupies a lane-aligned Hp=128-wide group, the class dim is
    lane-dense, and the embedding dim is bf16-sublane aligned; pre-scales the g-gate columns
    by 2 (tanh-via-sigmoid trick); packs biases / fc weights; casts matmul weights to bf16.
    Padding is exact: padded hidden lanes see zero weights + zero bias, so i=f=o=0.5, g=0,
    c stays 0 and h = 0.5*tanh(0) = 0; padded rows/cols of downstream weights are 0.
    """
    E, G = params["w_ih"].shape
    H = G // 4
    F1 = params["fc1_w"].shape[1]
    C = params["fc2_w"].shape[1]
    assert F1 == 128, "module spec: fc1 = Linear(hidden_dim, 128)"

    Hp = _round_up(H, 128)   # lane-aligned gate groups
    assert Hp == 128, "fc-weight packing assumes hidden_dim <= 128"
    Ep = _round_up(E, 16)    # bf16 sublane-packing granularity
    Cp = _round_up(C, 128)   # lane-dense output stores

    def gate_cols(w):  # (rows, 4H) -> (rows, 4Hp); per-gate column pad; g-gate pre-scaled x2
        rows = w.shape[0]
        w4 = w.reshape(rows, 4, H)
        w4 = w4.at[:, 2, :].multiply(2.0)        # tanh(z) = 2*sigmoid(2z) - 1
        out = jnp.zeros((rows, 4, Hp), jnp.float32).at[:, :, :H].set(w4)
        return out.reshape(rows, 4 * Hp)

    w_ih = jnp.zeros((Ep, 4 * Hp), jnp.float32).at[:E, :].set(gate_cols(params["w_ih"]))
    w_hh = jnp.zeros((Hp, 4 * Hp), jnp.float32).at[:H, :].set(gate_cols(params["w_hh"]))
    b_lstm = gate_cols(params["b_lstm"])                                       # (1, 4Hp)
    fc1_w = jnp.zeros((Hp, F1), jnp.float32).at[:H, :].set(params["fc1_w"])    # (128, 128)
    fc2_w = jnp.zeros((F1, Cp), jnp.float32).at[:, :C].set(params["fc2_w"])    # (128, Cp)
    fc2_b = jnp.zeros((1, Cp), jnp.float32).at[:, :C].set(params["fc2_b"])     # (1, Cp)

    return {
        "w_ih": w_ih.astype(jnp.bfloat16),                                     # (Ep, 4Hp)
        "w_hh": w_hh.astype(jnp.bfloat16),                                     # (Hp, 4Hp)
        "b_pack": jnp.concatenate([b_lstm, params["fc1_b"], fc2_b], axis=1),   # (1, 4Hp+128+Cp)
        "fcw_pack": jnp.concatenate([fc1_w, fc2_w], axis=1).astype(jnp.bfloat16),  # (128, 128+Cp)
    }


@functools.partial(jax.jit, static_argnames=("num_classes",))
def expense_classifier_forward(x_bse, prepared, *, num_classes):
    """x_bse: (B, S, E) batch-first, like the PyTorch module. Returns (B, num_classes) logits."""
    B, S, E = x_bse.shape
    w_ih, w_hh = prepared["w_ih"], prepared["w_hh"]
    b_pack, fcw_pack = prepared["b_pack"], prepared["fcw_pack"]
    Ep, G = w_ih.shape
    Bp = _round_up(B, 8)                 # sublane-aligned batch
    Cp = fcw_pack.shape[1] - 128

    # Time-major + batch/embedding pad + bf16 cast, flattened so the hoisted projection is one
    # (S*Bp, Ep) @ (Ep, 4Hp) matmul. (Only activation prep remains in the per-call path.)
    x_sbe = jnp.transpose(x_bse, (1, 0, 2)).astype(jnp.bfloat16)               # (S, B, E)
    x_pad = jnp.zeros((S, Bp, Ep), jnp.bfloat16).at[:, :B, :E].set(x_sbe)      # (S, Bp, Ep)
    x_flat = x_pad.reshape(S * Bp, Ep)

    vmem_spec = pl.BlockSpec(memory_space=pltpu.MemorySpace.VMEM)
    out = pl.pallas_call(
        _lstm_mlp_kernel,
        out_shape=jax.ShapeDtypeStruct((Bp, Cp), jnp.float32),
        in_specs=[vmem_spec] * 5,
        out_specs=vmem_spec,
        scratch_shapes=[
            pltpu.VMEM((S, Bp, G), jnp.float32),   # precomputed input projection, all steps
        ],
    )(x_flat, w_ih, w_hh, b_pack, fcw_pack)

    return out[:B, :num_classes]


def _reference_forward(x_bse, params):
    """Pure-JAX f32 reference replicating the PyTorch forward, for correctness check."""
    H = params["w_hh"].shape[0]
    B, S, E = x_bse.shape
    h = jnp.zeros((B, H), jnp.float32)
    c = jnp.zeros((B, H), jnp.float32)
    for t in range(S):
        gates = x_bse[:, t, :] @ params["w_ih"] + h @ params["w_hh"] + params["b_lstm"]
        i_g = jax.nn.sigmoid(gates[:, 0 * H:1 * H])
        f_g = jax.nn.sigmoid(gates[:, 1 * H:2 * H])
        g_g = jnp.tanh(gates[:, 2 * H:3 * H])
        o_g = jax.nn.sigmoid(gates[:, 3 * H:4 * H])
        c = f_g * c + i_g * g_g
        h = o_g * jnp.tanh(c)
    z1 = jnp.maximum(h @ params["fc1_w"] + params["fc1_b"], 0.0)
    return z1 @ params["fc2_w"] + params["fc2_b"]


def init_params(key, embedding_dim, hidden_dim, num_classes):
    ks = jax.random.split(key, 8)
    scale = 0.1
    # PyTorch nn.LSTM stores weight_ih_l0 as (4H, E); we keep the transposed (E, 4H) layout so
    # the kernel does x @ W. Gate order [i, f, g, o] matches PyTorch.
    w_ih = scale * jax.random.normal(ks[0], (embedding_dim, 4 * hidden_dim), jnp.float32)
    w_hh = scale * jax.random.normal(ks[1], (hidden_dim, 4 * hidden_dim), jnp.float32)
    b_ih = scale * jax.random.normal(ks[2], (1, 4 * hidden_dim), jnp.float32)
    b_hh = scale * jax.random.normal(ks[3], (1, 4 * hidden_dim), jnp.float32)
    fc1_w = scale * jax.random.normal(ks[4], (hidden_dim, 128), jnp.float32)
    fc1_b = scale * jax.random.normal(ks[5], (1, 128), jnp.float32)
    fc2_w = scale * jax.random.normal(ks[6], (128, num_classes), jnp.float32)
    fc2_b = scale * jax.random.normal(ks[7], (1, num_classes), jnp.float32)
    return {
        "w_ih": w_ih, "w_hh": w_hh, "b_lstm": b_ih + b_hh,
        "fc1_w": fc1_w, "fc1_b": fc1_b, "fc2_w": fc2_w, "fc2_b": fc2_b,
    }


if __name__ == "__main__":
    # Small shapes consistent with the module: (batch, seq, embedding_dim), hidden=64, classes=8.
    B, S, E, H, C = 2, 8, 32, 64, 8

    key = jax.random.PRNGKey(0)
    k_x, k_p = jax.random.split(key)
    x = jax.random.normal(k_x, (B, S, E), jnp.float32)
    params = init_params(k_p, E, H, C)

    # One-time weight prep (padding / packing / bf16 cast) — outside the per-call path.
    prepared = prepare_params(params)

    logits = expense_classifier_forward(x, prepared, num_classes=C)
    logits = jax.block_until_ready(logits)

    ref = _reference_forward(x, params)
    assert logits.shape == (B, C)
    # bf16 MXU operands (f32 accumulation) => looser tolerance than the pure-f32 version.
    assert jnp.allclose(logits, ref, atol=2e-2, rtol=2e-2), "mismatch vs pure-JAX reference"

    print("KERNEL_OK")
</pallas_src>

<mosaic_0001>
module attributes {stable_mosaic.version = 11 : i64} {
  func.func @_lstm_mlp_kernel(%arg0: memref<64x32xbf16, #tpu.memory_space<vmem>>, %arg1: memref<32x512xbf16, #tpu.memory_space<vmem>>, %arg2: memref<128x512xbf16, #tpu.memory_space<vmem>>, %arg3: memref<1x768xf32, #tpu.memory_space<vmem>>, %arg4: memref<128x256xbf16, #tpu.memory_space<vmem>>, %arg5: memref<8x128xf32, #tpu.memory_space<vmem>>, %arg6: memref<8x8x512xf32, #tpu.memory_space<vmem>>) attributes {dimension_semantics = [], scalar_prefetch = 0 : i64, scratch_operands = 1 : i64, tpu.core_type = #tpu.core_type<tc>} {
    %c0 = arith.constant 0 : index
    %c0_0 = arith.constant 0 : index
    %0 = vector.load %arg0[%c0, %c0_0] : memref<64x32xbf16, #tpu.memory_space<vmem>>, vector<64x32xbf16>
    %c0_1 = arith.constant 0 : index
    %c0_2 = arith.constant 0 : index
    %1 = vector.load %arg1[%c0_1, %c0_2] : memref<32x512xbf16, #tpu.memory_space<vmem>>, vector<32x512xbf16>
    %cst = arith.constant dense<0.000000e+00> : vector<64x512xf32>
    %2 = tpu.matmul %0, %1, %cst {dimension_numbers = #tpu.dot_dimension_numbers<[1], [0], [0], [1], [0, 0, 1, 1], [], []>} : vector<64x32xbf16>, vector<32x512xbf16>, vector<64x512xf32> -> vector<64x512xf32>
    %c0_3 = arith.constant 0 : index
    %c0_4 = arith.constant 0 : index
    %3 = vector.load %arg3[%c0_3, %c0_4] : memref<1x768xf32, #tpu.memory_space<vmem>>, vector<1x512xf32>
    %4 = vector.broadcast %3 : vector<1x512xf32> to vector<64x512xf32>
    %5 = arith.addf %2, %4 : vector<64x512xf32>
    %6 = vector.shape_cast %5 : vector<64x512xf32> to vector<8x8x512xf32>
    %c0_5 = arith.constant 0 : index
    %c0_6 = arith.constant 0 : index
    %c0_7 = arith.constant 0 : index
    %7 = vector.load %arg6[%c0_5, %c0_6, %c0_7] : memref<8x8x512xf32, #tpu.memory_space<vmem>>, vector<8x8x512xf32>
    tpu.vector_store %arg6[%c0_5, %c0_6, %c0_7], %6 {strides = array<i32>} : memref<8x8x512xf32, #tpu.memory_space<vmem>>, vector<8x8x512xf32>,
    %cst_8 = arith.constant 0.000000e+00 : f32
    %8 = vector.broadcast %cst_8 : f32 to vector<8x128xf32>
    %cst_9 = arith.constant 0.000000e+00 : f32
    %9 = vector.broadcast %cst_9 : f32 to vector<8x128xf32>
    %10 = arith.truncf %8 : vector<8x128xf32> to vector<8x128xbf16>
    %c0_10 = arith.constant 0 : index
    %c0_11 = arith.constant 0 : index
    %11 = vector.load %arg2[%c0_10, %c0_11] : memref<128x512xbf16, #tpu.memory_space<vmem>>, vector<128x512xbf16>
    %cst_12 = arith.constant dense<0.000000e+00> : vector<8x512xf32>
    %12 = tpu.matmul %10, %11, %cst_12 {dimension_numbers = #tpu.dot_dimension_numbers<[1], [0], [0], [1], [0, 0, 1, 1], [], []>} : vector<8x128xbf16>, vector<128x512xbf16>, vector<8x512xf32> -> vector<8x512xf32>
    %c0_13 = arith.constant 0 : index
    %c0_14 = arith.constant 0 : index
    %c0_15 = arith.constant 0 : index
    %13 = vector.load %arg6[%c0_13, %c0_14, %c0_15] : memref<8x8x512xf32, #tpu.memory_space<vmem>>, vector<1x8x512xf32>
    %14 = vector.shape_cast %13 : vector<1x8x512xf32> to vector<8x512xf32>
    %15 = arith.addf %12, %14 : vector<8x512xf32>
    %16 = arith.negf %15 : vector<8x512xf32>
    %17 = math.exp %16 : vector<8x512xf32>
    %cst_16 = arith.constant 1.000000e+00 : f32
    %18 = vector.broadcast %cst_16 : f32 to vector<8x512xf32>
    %19 = arith.addf %18, %17 : vector<8x512xf32>
    %20 = arith.divf %18, %19 : vector<8x512xf32>
    %21 = vector.extract_strided_slice %20 {offsets = [0, 0], sizes = [8, 128], strides = [1, 1]} : vector<8x512xf32> to vector<8x128xf32>
    %22 = vector.extract_strided_slice %20 {offsets = [0, 128], sizes = [8, 128], strides = [1, 1]} : vector<8x512xf32> to vector<8x128xf32>
    %23 = vector.extract_strided_slice %20 {offsets = [0, 256], sizes = [8, 128], strides = [1, 1]} : vector<8x512xf32> to vector<8x128xf32>
    %cst_17 = arith.constant 2.000000e+00 : f32
    %24 = vector.broadcast %cst_17 : f32 to vector<8x128xf32>
    %25 = arith.mulf %24, %23 : vector<8x128xf32>
    %cst_18 = arith.constant 1.000000e+00 : f32
    %26 = vector.broadcast %cst_18 : f32 to vector<8x128xf32>
    %27 = arith.subf %25, %26 : vector<8x128xf32>
    %28 = vector.extract_strided_slice %20 {offsets = [0, 384], sizes = [8, 128], strides = [1, 1]} : vector<8x512xf32> to vector<8x128xf32>
    %29 = arith.mulf %22, %9 : vector<8x128xf32>
    %30 = arith.mulf %21, %27 : vector<8x128xf32>
    %31 = arith.addf %29, %30 : vector<8x128xf32>
    %32 = math.tanh %31 : vector<8x128xf32>
    %33 = arith.mulf %28, %32 : vector<8x128xf32>
    %34 = arith.truncf %33 : vector<8x128xf32> to vector<8x128xbf16>
    %c0_19 = arith.constant 0 : index
    %c0_20 = arith.constant 0 : index
    %35 = vector.load %arg2[%c0_19, %c0_20] : memref<128x512xbf16, #tpu.memory_space<vmem>>, vector<128x512xbf16>
    %cst_21 = arith.constant dense<0.000000e+00> : vector<8x512xf32>
    %36 = tpu.matmul %34, %35, %cst_21 {dimension_numbers = #tpu.dot_dimension_numbers<[1], [0], [0], [1], [0, 0, 1, 1], [], []>} : vector<8x128xbf16>, vector<128x512xbf16>, vector<8x512xf32> -> vector<8x512xf32>
    %c1 = arith.constant 1 : index
    %c0_22 = arith.constant 0 : index
    %c0_23 = arith.constant 0 : index
    %37 = vector.load %arg6[%c1, %c0_22, %c0_23] : memref<8x8x512xf32, #tpu.memory_space<vmem>>, vector<1x8x512xf32>
    %38 = vector.shape_cast %37 : vector<1x8x512xf32> to vector<8x512xf32>
    %39 = arith.addf %36, %38 : vector<8x512xf32>
    %40 = arith.negf %39 : vector<8x512xf32>
    %41 = math.exp %40 : vector<8x512xf32>
    %cst_24 = arith.constant 1.000000e+00 : f32
    %42 = vector.broadcast %cst_24 : f32 to vector<8x512xf32>
    %43 = arith.addf %42, %41 : vector<8x512xf32>
    %44 = arith.divf %42, %43 : vector<8x512xf32>
    %45 = vector.extract_strided_slice %44 {offsets = [0, 0], sizes = [8, 128], strides = [1, 1]} : vector<8x512xf32> to vector<8x128xf32>
    %46 = vector.extract_strided_slice %44 {offsets = [0, 128], sizes = [8, 128], strides = [1, 1]} : vector<8x512xf32> to vector<8x128xf32>
    %47 = vector.extract_strided_slice %44 {offsets = [0, 256], sizes = [8, 128], strides = [1, 1]} : vector<8x512xf32> to vector<8x128xf32>
    %cst_25 = arith.constant 2.000000e+00 : f32
    %48 = vector.broadcast %cst_25 : f32 to vector<8x128xf32>
    %49 = arith.mulf %48, %47 : vector<8x128xf32>
    %cst_26 = arith.constant 1.000000e+00 : f32
    %50 = vector.broadcast %cst_26 : f32 to vector<8x128xf32>
    %51 = arith.subf %49, %50 : vector<8x128xf32>
    %52 = vector.extract_strided_slice %44 {offsets = [0, 384], sizes = [8, 128], strides = [1, 1]} : vector<8x512xf32> to vector<8x128xf32>
    %53 = arith.mulf %46, %31 : vector<8x128xf32>
    %54 = arith.mulf %45, %51 : vector<8x128xf32>
    %55 = arith.addf %53, %54 : vector<8x128xf32>
    %56 = math.tanh %55 : vector<8x128xf32>
    %57 = arith.mulf %52, %56 : vector<8x128xf32>
    %58 = arith.truncf %57 : vector<8x128xf32> to vector<8x128xbf16>
    %c0_27 = arith.constant 0 : index
    %c0_28 = arith.constant 0 : index
    %59 = vector.load %arg2[%c0_27, %c0_28] : memref<128x512xbf16, #tpu.memory_space<vmem>>, vector<128x512xbf16>
    %cst_29 = arith.constant dense<0.000000e+00> : vector<8x512xf32>
    %60 = tpu.matmul %58, %59, %cst_29 {dimension_numbers = #tpu.dot_dimension_numbers<[1], [0], [0], [1], [0, 0, 1, 1], [], []>} : vector<8x128xbf16>, vector<128x512xbf16>, vector<8x512xf32> -> vector<8x512xf32>
    %c2 = arith.constant 2 : index
    %c0_30 = arith.constant 0 : index
    %c0_31 = arith.constant 0 : index
    %61 = vector.load %arg6[%c2, %c0_30, %c0_31] : memref<8x8x512xf32, #tpu.memory_space<vmem>>, vector<1x8x512xf32>
    %62 = vector.shape_cast %61 : vector<1x8x512xf32> to vector<8x512xf32>
    %63 = arith.addf %60, %62 : vector<8x512xf32>
    %64 = arith.negf %63 : vector<8x512xf32>
    %65 = math.exp %64 : vector<8x512xf32>
    %cst_32 = arith.constant 1.000000e+00 : f32
    %66 = vector.broadcast %cst_32 : f32 to vector<8x512xf32>
    %67 = arith.addf %66, %65 : vector<8x512xf32>
    %68 = arith.divf %66, %67 : vector<8x512xf32>
    %69 = vector.extract_strided_slice %68 {offsets = [0, 0], sizes = [8, 128], strides = [1, 1]} : vector<8x512xf32> to vector<8x128xf32>
    %70 = vector.extract_strided_slice %68 {offsets = [0, 128], sizes = [8, 128], strides = [1, 1]} : vector<8x512xf32> to vector<8x128xf32>
    %71 = vector.extract_strided_slice %68 {offsets = [0, 256], sizes = [8, 128], strides = [1, 1]} : vector<8x512xf32> to vector<8x128xf32>
    %cst_33 = arith.constant 2.000000e+00 : f32
    %72 = vector.broadcast %cst_33 : f32 to vector<8x128xf32>
    %73 = arith.mulf %72, %71 : vector<8x128xf32>
    %cst_34 = arith.constant 1.000000e+00 : f32
    %74 = vector.broadcast %cst_34 : f32 to vector<8x128xf32>
    %75 = arith.subf %73, %74 : vector<8x128xf32>
    %76 = vector.extract_strided_slice %68 {offsets = [0, 384], sizes = [8, 128], strides = [1, 1]} : vector<8x512xf32> to vector<8x128xf32>
    %77 = arith.mulf %70, %55 : vector<8x128xf32>
    %78 = arith.mulf %69, %75 : vector<8x128xf32>
    %79 = arith.addf %77, %78 : vector<8x128xf32>
    %80 = math.tanh %79 : vector<8x128xf32>
    %81 = arith.mulf %76, %80 : vector<8x128xf32>
    %82 = arith.truncf %81 : vector<8x128xf32> to vector<8x128xbf16>
    %c0_35 = arith.constant 0 : index
    %c0_36 = arith.constant 0 : index
    %83 = vector.load %arg2[%c0_35, %c0_36] : memref<128x512xbf16, #tpu.memory_space<vmem>>, vector<128x512xbf16>
    %cst_37 = arith.constant dense<0.000000e+00> : vector<8x512xf32>
    %84 = tpu.matmul %82, %83, %cst_37 {dimension_numbers = #tpu.dot_dimension_numbers<[1], [0], [0], [1], [0, 0, 1, 1], [], []>} : vector<8x128xbf16>, vector<128x512xbf16>, vector<8x512xf32> -> vector<8x512xf32>
    %c3 = arith.constant 3 : index
    %c0_38 = arith.constant 0 : index
    %c0_39 = arith.constant 0 : index
    %85 = vector.load %arg6[%c3, %c0_38, %c0_39] : memref<8x8x512xf32, #tpu.memory_space<vmem>>, vector<1x8x512xf32>
    %86 = vector.shape_cast %85 : vector<1x8x512xf32> to vector<8x512xf32>
    %87 = arith.addf %84, %86 : vector<8x512xf32>
    %88 = arith.negf %87 : vector<8x512xf32>
    %89 = math.exp %88 : vector<8x512xf32>
    %cst_40 = arith.constant 1.000000e+00 : f32
    %90 = vector.broadcast %cst_40 : f32 to vector<8x512xf32>
    %91 = arith.addf %90, %89 : vector<8x512xf32>
    %92 = arith.divf %90, %91 : vector<8x512xf32>
    %93 = vector.extract_strided_slice %92 {offsets = [0, 0], sizes = [8, 128], strides = [1, 1]} : vector<8x512xf32> to vector<8x128xf32>
    %94 = vector.extract_strided_slice %92 {offsets = [0, 128], sizes = [8, 128], strides = [1, 1]} : vector<8x512xf32> to vector<8x128xf32>
    %95 = vector.extract_strided_slice %92 {offsets = [0, 256], sizes = [8, 128], strides = [1, 1]} : vector<8x512xf32> to vector<8x128xf32>
    %cst_41 = arith.constant 2.000000e+00 : f32
    %96 = vector.broadcast %cst_41 : f32 to vector<8x128xf32>
    %97 = arith.mulf %96, %95 : vector<8x128xf32>
    %cst_42 = arith.constant 1.000000e+00 : f32
    %98 = vector.broadcast %cst_42 : f32 to vector<8x128xf32>
    %99 = arith.subf %97, %98 : vector<8x128xf32>
    %100 = vector.extract_strided_slice %92 {offsets = [0, 384], sizes = [8, 128], strides = [1, 1]} : vector<8x512xf32> to vector<8x128xf32>
    %101 = arith.mulf %94, %79 : vector<8x128xf32>
    %102 = arith.mulf %93, %99 : vector<8x128xf32>
    %103 = arith.addf %101, %102 : vector<8x128xf32>
    %104 = math.tanh %103 : vector<8x128xf32>
    %105 = arith.mulf %100, %104 : vector<8x128xf32>
    %106 = arith.truncf %105 : vector<8x128xf32> to vector<8x128xbf16>
    %c0_43 = arith.constant 0 : index
    %c0_44 = arith.constant 0 : index
    %107 = vector.load %arg2[%c0_43, %c0_44] : memref<128x512xbf16, #tpu.memory_space<vmem>>, vector<128x512xbf16>
    %cst_45 = arith.constant dense<0.000000e+00> : vector<8x512xf32>
    %108 = tpu.matmul %106, %107, %cst_45 {dimension_numbers = #tpu.dot_dimension_numbers<[1], [0], [0], [1], [0, 0, 1, 1], [], []>} : vector<8x128xbf16>, vector<128x512xbf16>, vector<8x512xf32> -> vector<8x512xf32>
    %c4 = arith.constant 4 : index
    %c0_46 = arith.constant 0 : index
    %c0_47 = arith.constant 0 : index
    %109 = vector.load %arg6[%c4, %c0_46, %c0_47] : memref<8x8x512xf32, #tpu.memory_space<vmem>>, vector<1x8x512xf32>
    %110 = vector.shape_cast %109 : vector<1x8x512xf32> to vector<8x512xf32>
    %111 = arith.addf %108, %110 : vector<8x512xf32>
    %112 = arith.negf %111 : vector<8x512xf32>
    %113 = math.exp %112 : vector<8x512xf32>
    %cst_48 = arith.constant 1.000000e+00 : f32
    %114 = vector.broadcast %cst_48 : f32 to vector<8x512xf32>
    %115 = arith.addf %114, %113 : vector<8x512xf32>
    %116 = arith.divf %114, %115 : vector<8x512xf32>
    %117 = vector.extract_strided_slice %116 {offsets = [0, 0], sizes = [8, 128], strides = [1, 1]} : vector<8x512xf32> to vector<8x128xf32>
    %118 = vector.extract_strided_slice %116 {offsets = [0, 128], sizes = [8, 128], strides = [1, 1]} : vector<8x512xf32> to vector<8x128xf32>
    %119 = vector.extract_strided_slice %116 {offsets = [0, 256], sizes = [8, 128], strides = [1, 1]} : vector<8x512xf32> to vector<8x128xf32>
    %cst_49 = arith.constant 2.000000e+00 : f32
    %120 = vector.broadcast %cst_49 : f32 to vector<8x128xf32>
    %121 = arith.mulf %120, %119 : vector<8x128xf32>
    %cst_50 = arith.constant 1.000000e+00 : f32
    %122 = vector.broadcast %cst_50 : f32 to vector<8x128xf32>
    %123 = arith.subf %121, %122 : vector<8x128xf32>
    %124 = vector.extract_strided_slice %116 {offsets = [0, 384], sizes = [8, 128], strides = [1, 1]} : vector<8x512xf32> to vector<8x128xf32>
    %125 = arith.mulf %118, %103 : vector<8x128xf32>
    %126 = arith.mulf %117, %123 : vector<8x128xf32>
    %127 = arith.addf %125, %126 : vector<8x128xf32>
    %128 = math.tanh %127 : vector<8x128xf32>
    %129 = arith.mulf %124, %128 : vector<8x128xf32>
    %130 = arith.truncf %129 : vector<8x128xf32> to vector<8x128xbf16>
    %c0_51 = arith.constant 0 : index
    %c0_52 = arith.constant 0 : index
    %131 = vector.load %arg2[%c0_51, %c0_52] : memref<128x512xbf16, #tpu.memory_space<vmem>>, vector<128x512xbf16>
    %cst_53 = arith.constant dense<0.000000e+00> : vector<8x512xf32>
    %132 = tpu.matmul %130, %131, %cst_53 {dimension_numbers = #tpu.dot_dimension_numbers<[1], [0], [0], [1], [0, 0, 1, 1], [], []>} : vector<8x128xbf16>, vector<128x512xbf16>, vector<8x512xf32> -> vector<8x512xf32>
    %c5 = arith.constant 5 : index
    %c0_54 = arith.constant 0 : index
    %c0_55 = arith.constant 0 : index
    %133 = vector.load %arg6[%c5, %c0_54, %c0_55] : memref<8x8x512xf32, #tpu.memory_space<vmem>>, vector<1x8x512xf32>
    %134 = vector.shape_cast %133 : vector<1x8x512xf32> to vector<8x512xf32>
    %135 = arith.addf %132, %134 : vector<8x512xf32>
    %136 = arith.negf %135 : vector<8x512xf32>
    %137 = math.exp %136 : vector<8x512xf32>
    %cst_56 = arith.constant 1.000000e+00 : f32
    %138 = vector.broadcast %cst_56 : f32 to vector<8x512xf32>
    %139 = arith.addf %138, %137 : vector<8x512xf32>
    %140 = arith.divf %138, %139 : vector<8x512xf32>
    %141 = vector.extract_strided_slice %140 {offsets = [0, 0], sizes = [8, 128], strides = [1, 1]} : vector<8x512xf32> to vector<8x128xf32>
    %142 = vector.extract_strided_slice %140 {offsets = [0, 128], sizes = [8, 128], strides = [1, 1]} : vector<8x512xf32> to vector<8x128xf32>
    %143 = vector.extract_strided_slice %140 {offsets = [0, 256], sizes = [8, 128], strides = [1, 1]} : vector<8x512xf32> to vector<8x128xf32>
    %cst_57 = arith.constant 2.000000e+00 : f32
    %144 = vector.broadcast %cst_57 : f32 to vector<8x128xf32>
    %145 = arith.mulf %144, %143 : vector<8x128xf32>
    %cst_58 = arith.constant 1.000000e+00 : f32
    %146 = vector.broadcast %cst_58 : f32 to vector<8x128xf32>
    %147 = arith.subf %145, %146 : vector<8x128xf32>
    %148 = vector.extract_strided_slice %140 {offsets = [0, 384], sizes = [8, 128], strides = [1, 1]} : vector<8x512xf32> to vector<8x128xf32>
    %149 = arith.mulf %142, %127 : vector<8x128xf32>
    %150 = arith.mulf %141, %147 : vector<8x128xf32>
    %151 = arith.addf %149, %150 : vector<8x128xf32>
    %152 = math.tanh %151 : vector<8x128xf32>
    %153 = arith.mulf %148, %152 : vector<8x128xf32>
    %154 = arith.truncf %153 : vector<8x128xf32> to vector<8x128xbf16>
    %c0_59 = arith.constant 0 : index
    %c0_60 = arith.constant 0 : index
    %155 = vector.load %arg2[%c0_59, %c0_60] : memref<128x512xbf16, #tpu.memory_space<vmem>>, vector<128x512xbf16>
    %cst_61 = arith.constant dense<0.000000e+00> : vector<8x512xf32>
    %156 = tpu.matmul %154, %155, %cst_61 {dimension_numbers = #tpu.dot_dimension_numbers<[1], [0], [0], [1], [0, 0, 1, 1], [], []>} : vector<8x128xbf16>, vector<128x512xbf16>, vector<8x512xf32> -> vector<8x512xf32>
    %c6 = arith.constant 6 : index
    %c0_62 = arith.constant 0 : index
    %c0_63 = arith.constant 0 : index
    %157 = vector.load %arg6[%c6, %c0_62, %c0_63] : memref<8x8x512xf32, #tpu.memory_space<vmem>>, vector<1x8x512xf32>
    %158 = vector.shape_cast %157 : vector<1x8x512xf32> to vector<8x512xf32>
    %159 = arith.addf %156, %158 : vector<8x512xf32>
    %160 = arith.negf %159 : vector<8x512xf32>
    %161 = math.exp %160 : vector<8x512xf32>
    %cst_64 = arith.constant 1.000000e+00 : f32
    %162 = vector.broadcast %cst_64 : f32 to vector<8x512xf32>
    %163 = arith.addf %162, %161 : vector<8x512xf32>
    %164 = arith.divf %162, %163 : vector<8x512xf32>
    %165 = vector.extract_strided_slice %164 {offsets = [0, 0], sizes = [8, 128], strides = [1, 1]} : vector<8x512xf32> to vector<8x128xf32>
    %166 = vector.extract_strided_slice %164 {offsets = [0, 128], sizes = [8, 128], strides = [1, 1]} : vector<8x512xf32> to vector<8x128xf32>
    %167 = vector.extract_strided_slice %164 {offsets = [0, 256], sizes = [8, 128], strides = [1, 1]} : vector<8x512xf32> to vector<8x128xf32>
    %cst_65 = arith.constant 2.000000e+00 : f32
    %168 = vector.broadcast %cst_65 : f32 to vector<8x128xf32>
    %169 = arith.mulf %168, %167 : vector<8x128xf32>
    %cst_66 = arith.constant 1.000000e+00 : f32
    %170 = vector.broadcast %cst_66 : f32 to vector<8x128xf32>
    %171 = arith.subf %169, %170 : vector<8x128xf32>
    %172 = vector.extract_strided_slice %164 {offsets = [0, 384], sizes = [8, 128], strides = [1, 1]} : vector<8x512xf32> to vector<8x128xf32>
    %173 = arith.mulf %166, %151 : vector<8x128xf32>
    %174 = arith.mulf %165, %171 : vector<8x128xf32>
    %175 = arith.addf %173, %174 : vector<8x128xf32>
    %176 = math.tanh %175 : vector<8x128xf32>
    %177 = arith.mulf %172, %176 : vector<8x128xf32>
    %178 = arith.truncf %177 : vector<8x128xf32> to vector<8x128xbf16>
    %c0_67 = arith.constant 0 : index
    %c0_68 = arith.constant 0 : index
    %179 = vector.load %arg2[%c0_67, %c0_68] : memref<128x512xbf16, #tpu.memory_space<vmem>>, vector<128x512xbf16>
    %cst_69 = arith.constant dense<0.000000e+00> : vector<8x512xf32>
    %180 = tpu.matmul %178, %179, %cst_69 {dimension_numbers = #tpu.dot_dimension_numbers<[1], [0], [0], [1], [0, 0, 1, 1], [], []>} : vector<8x128xbf16>, vector<128x512xbf16>, vector<8x512xf32> -> vector<8x512xf32>
    %c7 = arith.constant 7 : index
    %c0_70 = arith.constant 0 : index
    %c0_71 = arith.constant 0 : index
    %181 = vector.load %arg6[%c7, %c0_70, %c0_71] : memref<8x8x512xf32, #tpu.memory_space<vmem>>, vector<1x8x512xf32>
    %182 = vector.shape_cast %181 : vector<1x8x512xf32> to vector<8x512xf32>
    %183 = arith.addf %180, %182 : vector<8x512xf32>
    %184 = arith.negf %183 : vector<8x512xf32>
    %185 = math.exp %184 : vector<8x512xf32>
    %cst_72 = arith.constant 1.000000e+00 : f32
    %186 = vector.broadcast %cst_72 : f32 to vector<8x512xf32>
    %187 = arith.addf %186, %185 : vector<8x512xf32>
    %188 = arith.divf %186, %187 : vector<8x512xf32>
    %189 = vector.extract_strided_slice %188 {offsets = [0, 0], sizes = [8, 128], strides = [1, 1]} : vector<8x512xf32> to vector<8x128xf32>
    %190 = vector.extract_strided_slice %188 {offsets = [0, 128], sizes = [8, 128], strides = [1, 1]} : vector<8x512xf32> to vector<8x128xf32>
    %191 = vector.extract_strided_slice %188 {offsets = [0, 256], sizes = [8, 128], strides = [1, 1]} : vector<8x512xf32> to vector<8x128xf32>
    %cst_73 = arith.constant 2.000000e+00 : f32
    %192 = vector.broadcast %cst_73 : f32 to vector<8x128xf32>
    %193 = arith.mulf %192, %191 : vector<8x128xf32>
    %cst_74 = arith.constant 1.000000e+00 : f32
    %194 = vector.broadcast %cst_74 : f32 to vector<8x128xf32>
    %195 = arith.subf %193, %194 : vector<8x128xf32>
    %196 = vector.extract_strided_slice %188 {offsets = [0, 384], sizes = [8, 128], strides = [1, 1]} : vector<8x512xf32> to vector<8x128xf32>
    %197 = arith.mulf %190, %175 : vector<8x128xf32>
    %198 = arith.mulf %189, %195 : vector<8x128xf32>
    %199 = arith.addf %197, %198 : vector<8x128xf32>
    %200 = math.tanh %199 : vector<8x128xf32>
    %201 = arith.mulf %196, %200 : vector<8x128xf32>
    %c0_75 = arith.constant 0 : index
    %c512 = arith.constant 512 : index
    %202 = vector.load %arg3[%c0_75, %c512] : memref<1x768xf32, #tpu.memory_space<vmem>>, vector<1x128xf32>
    %c0_76 = arith.constant 0 : index
    %c640 = arith.constant 640 : index
    %203 = vector.load %arg3[%c0_76, %c640] : memref<1x768xf32, #tpu.memory_space<vmem>>, vector<1x128xf32>
    %204 = arith.truncf %201 : vector<8x128xf32> to vector<8x128xbf16>
    %c0_77 = arith.constant 0 : index
    %c0_78 = arith.constant 0 : index
    %205 = vector.load %arg4[%c0_77, %c0_78] : memref<128x256xbf16, #tpu.memory_space<vmem>>, vector<128x128xbf16>
    %cst_79 = arith.constant dense<0.000000e+00> : vector<8x128xf32>
    %206 = tpu.matmul %204, %205, %cst_79 {dimension_numbers = #tpu.dot_dimension_numbers<[1], [0], [0], [1], [0, 0, 1, 1], [], []>} : vector<8x128xbf16>, vector<128x128xbf16>, vector<8x128xf32> -> vector<8x128xf32>
    %207 = vector.broadcast %202 : vector<1x128xf32> to vector<8x128xf32>
    %208 = arith.addf %206, %207 : vector<8x128xf32>
    %cst_80 = arith.constant 0.000000e+00 : f32
    %209 = vector.broadcast %cst_80 : f32 to vector<8x128xf32>
    %210 = arith.maximumf %208, %209 : vector<8x128xf32>
    %211 = arith.truncf %210 : vector<8x128xf32> to vector<8x128xbf16>
    %c0_81 = arith.constant 0 : index
    %c128 = arith.constant 128 : index
    %212 = vector.load %arg4[%c0_81, %c128] : memref<128x256xbf16, #tpu.memory_space<vmem>>, vector<128x128xbf16>
    %cst_82 = arith.constant dense<0.000000e+00> : vector<8x128xf32>
    %213 = tpu.matmul %211, %212, %cst_82 {dimension_numbers = #tpu.dot_dimension_numbers<[1], [0], [0], [1], [0, 0, 1, 1], [], []>} : vector<8x128xbf16>, vector<128x128xbf16>, vector<8x128xf32> -> vector<8x128xf32>
    %214 = vector.broadcast %203 : vector<1x128xf32> to vector<8x128xf32>
    %215 = arith.addf %213, %214 : vector<8x128xf32>
    %c0_83 = arith.constant 0 : index
    %c0_84 = arith.constant 0 : index
    %216 = vector.load %arg5[%c0_83, %c0_84] : memref<8x128xf32, #tpu.memory_space<vmem>>, vector<8x128xf32>
    tpu.vector_store %arg5[%c0_83, %c0_84], %215 {strides = array<i32>} : memref<8x128xf32, #tpu.memory_space<vmem>>, vector<8x128xf32>,
    return
  }
}

</mosaic_0001>

<llo_original>
// kernel: expense_classifier_forward.1
$region0: #{expense_classifier_forward.1}
  #allocation0 [shape = 'u32[]', space=smem, size = 0x4, offset = 0x4, fixed_abs, tag = 'smem constant byte address 0x4 - core index']
  #allocation1 [shape = 'u32[144,128]{1,0:T(1,128)}', space=vmem, size = 0x12000, scoped, tag = 'internal scratch']
  #allocation2 [shape = 'f32[8,8,512]{2,1,0:T(8,128)}', space=vmem, size = 0x20000, scoped, tag = 'scratch operand']
  %s0 = inlined_call_operand.vmem [shape: bf16[64,32], index: 0, kind: input, shape index: {}]
  %s1 = inlined_call_operand.vmem [shape: bf16[32,512], index: 1, kind: input, shape index: {}]
  %s2 = inlined_call_operand.hbm [shape: bf16[128,512], index: 2, kind: input, shape index: {}]
  %s3 = inlined_call_operand.vmem [shape: f32[1,768], index: 3, kind: input, shape index: {}]
  %s4 = inlined_call_operand.hbm [shape: bf16[128,256], index: 4, kind: input, shape index: {}]
  %s5 = inlined_call_operand.vmem [shape: f32[8,128], index: 5, kind: output, shape index: {}]
  %s6 = sld [smem:[#allocation0]]
  $region38: #{expense_classifier_forward.1} parent=0
    _
  %s8 = ssub.s32 1, %s6
  %s9 = scalar_select 0, %s8, %s6
  $region1: #{expense_classifier_forward.1} parent=0
    #allocation3 [shape = 'u8[131072]{0}', space=vmem, size = 0x20000, scoped, tag = 'input window, operand 2, single buffered']
    #allocation4 [shape = 's32[1]{0}', space=sflag, size = 0x4, scoped, tag = 'scoped memory for expense_classifier_forward.1']
    #allocation5 [shape = 'u8[65536]{0}', space=vmem, size = 0x10000, scoped, tag = 'input window, operand 4, single buffered']
    #allocation6 [shape = 's32[1]{0}', space=sflag, size = 0x4, scoped, tag = 'scoped memory for expense_classifier_forward.1']
    %10 = vsyncpa [#allocation4], 0
    %11 = vsyncpa [#allocation6], 0
    // Predicated region
    $region2: #{expense_classifier_forward.1} parent=1 // pred_check
      _
    $region3: #{expense_classifier_forward.1} parent=1 // pred_check_branch
      %13 = sbr.rel (0) target = $region5
    $region4: #{expense_classifier_forward.1} parent=1 // pred_region
      _
    $region5: #{expense_classifier_forward.1} parent=1 // pred_fallthru
      _
    // Predicated region
    $region6: #{expense_classifier_forward.1} parent=1 // pred_check
      _
    $region7: #{expense_classifier_forward.1} parent=1 // pred_check_branch
      %15 = sbr.rel (0) target = $region9
    $region8: #{expense_classifier_forward.1} parent=1 // pred_region
      _
    $region9: #{expense_classifier_forward.1} parent=1 // pred_fallthru
      _
    // Predicated region
    $region10: #{expense_classifier_forward.1} parent=1 // pred_check
      _
    $region11: #{expense_classifier_forward.1} parent=1 // pred_check_branch
      %17 = sbr.rel (0) target = $region13
    $region12: #{expense_classifier_forward.1} parent=1 // pred_region
      %s19 = ssub.s32 4096, 4096
      %20 = vsyncadd [#allocation4], %s19
      %s21 = sshll.u32 [#allocation3], 4
      %s22 = int_to_ptr.vmem [resolvable:$true] %s21
      %27 = dma.hbm_to_vmem [thread:$0]  %s2, 4096, %s22, [#allocation4], 256, 256, 16
    $region13: #{expense_classifier_forward.1} parent=1 // pred_fallthru
      _
    // Predicated region
    $region14: #{expense_classifier_forward.1} parent=1 // pred_check
      _
    $region15: #{expense_classifier_forward.1} parent=1 // pred_check_branch
      %29 = sbr.rel (0) target = $region17
    $region16: #{expense_classifier_forward.1} parent=1 // pred_region
      _
    $region17: #{expense_classifier_forward.1} parent=1 // pred_fallthru
      _
    // Predicated region
    $region18: #{expense_classifier_forward.1} parent=1 // pred_check
      _
    $region19: #{expense_classifier_forward.1} parent=1 // pred_check_branch
      %31 = sbr.rel (0) target = $region21
    $region20: #{expense_classifier_forward.1} parent=1 // pred_region
      %s33 = ssub.s32 2048, 2048
      %34 = vsyncadd [#allocation6], %s33
      %s35 = sshll.u32 [#allocation5], 4
      %s36 = int_to_ptr.vmem [resolvable:$true] %s35
      %41 = dma.hbm_to_vmem [thread:$0]  %s4, 2048, %s36, [#allocation6], 128, 128, 8
    $region21: #{expense_classifier_forward.1} parent=1 // pred_fallthru
      _
    // Predicated region
    $region22: #{expense_classifier_forward.1} parent=1 // pred_check
      _
    $region23: #{expense_classifier_forward.1} parent=1 // pred_check_branch
      %43 = sbr.rel (0) target = $region25
    $region24: #{expense_classifier_forward.1} parent=1 // pred_region
      %44 = dma.done [#allocation4], 4096
    $region25: #{expense_classifier_forward.1} parent=1 // pred_fallthru
      _
    // Predicated region
    $region26: #{expense_classifier_forward.1} parent=1 // pred_check
      _
    $region27: #{expense_classifier_forward.1} parent=1 // pred_check_branch
      %46 = sbr.rel (0) target = $region29
    $region28: #{expense_classifier_forward.1} parent=1 // pred_region
      %47 = dma.done [#allocation6], 2048
    $region29: #{expense_classifier_forward.1} parent=1 // pred_fallthru
      _
    %v49 = vld [vmem:[%s0] sm:$0xf]
    %v50 = vld [vmem:[%s0 + $0x4] sm:$0xf]
    %v51 = vld [vmem:[%s0 + $0x8] sm:$0xf]
    %v52 = vld [vmem:[%s0 + $0xc] sm:$0xf]
    %v53 = vld [vmem:[%s0 + $0x10] sm:$0xf]
    %v54 = vld [vmem:[%s0 + $0x14] sm:$0xf]
    %v55 = vld [vmem:[%s0 + $0x18] sm:$0xf]
    %v56 = vld [vmem:[%s0 + $0x1c] sm:$0xf]
    %v57 = vld [vmem:[%s1] sm:$0xff]
    %v58 = vld [vmem:[%s1 + $0x8] sm:$0xff]
    %v59 = vld [vmem:[%s1 + $0x10] sm:$0xff]
    %v60 = vld [vmem:[%s1 + $0x18] sm:$0xff]
    %v61 = vld [vmem:[%s1 + $0x20] sm:$0xff]
    %v62 = vld [vmem:[%s1 + $0x28] sm:$0xff]
    %v63 = vld [vmem:[%s1 + $0x30] sm:$0xff]
    %v64 = vld [vmem:[%s1 + $0x38] sm:$0xff]
    %v65 = vld [vmem:[%s3] sm:$0xf]
    %v67 = vlaneseq
    %v68 = vshrl.u32 %v67, 7
    %v69 = vsub.s32 0, %v68
    %v70 = vrot.slane %v65, %v69
    %v71 = vlaneseq
    %v72 = vshrl.u32 %v71, 7
    %v73 = vsub.s32 1, %v72
    %v74 = vrot.slane %v65, %v73
    %v75 = vlaneseq
    %v76 = vshrl.u32 %v75, 7
    %v77 = vsub.s32 2, %v76
    %v78 = vrot.slane %v65, %v77
    %v79 = vlaneseq
    %v80 = vshrl.u32 %v79, 7
    %v81 = vsub.s32 3, %v80
    %v82 = vrot.slane %v65, %v81
    %v95 = vunpack.c.l.b16 %v49
    %v96 = vunpack.c.l.b16 %v50
    %v97 = vunpack.c.l.b16 %v51
    %v98 = vunpack.c.l.b16 %v52
    %v99 = vunpack.c.l.b16 %v53
    %v100 = vunpack.c.l.b16 %v54
    %v101 = vunpack.c.l.b16 %v55
    %v102 = vunpack.c.l.b16 %v56
    %v103 = vpack.c.b16 %v96, %v95
    %v104 = vpack.c.b16 %v98, %v97
    %v105 = vpack.c.b16 %v100, %v99
    %v106 = vpack.c.b16 %v102, %v101
    %v115 = vunpack.c.l.b16 %v57
    %v116 = vunpack.c.h.b16 %v57
    %v117 = vunpack.c.l.b16 %v58
    %v118 = vunpack.c.h.b16 %v58
    %v119 = vunpack.c.l.b16 %v59
    %v120 = vunpack.c.h.b16 %v59
    %v121 = vunpack.c.l.b16 %v60
    %v122 = vunpack.c.h.b16 %v60
    %v123 = vunpack.c.l.b16 %v61
    %v124 = vunpack.c.h.b16 %v61
    %v125 = vunpack.c.l.b16 %v62
    %v126 = vunpack.c.h.b16 %v62
    %v127 = vunpack.c.l.b16 %v63
    %v128 = vunpack.c.h.b16 %v63
    %v129 = vunpack.c.l.b16 %v64
    %v130 = vunpack.c.h.b16 %v64
    %v131 = vpack.c.b16 %v119, %v115
    %v132 = vpack.c.b16 %v120, %v116
    %v133 = vpack.c.b16 %v121, %v117
    %v134 = vpack.c.b16 %v122, %v118
    %v135 = vpack.c.b16 %v127, %v123
    %v136 = vpack.c.b16 %v128, %v124
    %v137 = vpack.c.b16 %v129, %v125
    %v138 = vpack.c.b16 %v130, %v126
    %vm147 = vcmask 261120
    %v149 = vsel %vm147, %v103, 0
    %v152 = vsel %vm147, %v104, 0
    %v155 = vsel %vm147, %v105, 0
    %v158 = vsel %vm147, %v106, 0
    %160 = vmatprep.subr.bf16.mxu0 %v132
    %161 = vmatpush1.bf16.msra.mxu0 %v131
    %162 = vmatprep.subr.bf16.mxu0 %v136
    %163 = vmatpush1.bf16.msra.mxu0 %v135
    %164 = vmatprep.subr.bf16.mxu0 0
    %165 = vmatpush1.bf16.msra.mxu0 0
    %166 = vmatprep.subr.bf16.mxu0 0
    %167 = vmatpush1.bf16.msra.mxu0 0
    %168 = vmatprep.subr.bf16.mxu0 0
    %169 = vmatpush1.bf16.msra.mxu0 0
    %170 = vmatprep.subr.bf16.mxu0 0
    %171 = vmatpush1.bf16.msra.mxu0 0
    %172 = vmatprep.subr.bf16.mxu0 0
    %173 = vmatpush1.bf16.msra.mxu0 0
    %174 = vmatprep.subr.bf16.mxu0 0
    %175 = vmatpush1.bf16.msra.mxu0 0
    %176 = vmatprep.subr.bf16.mxu0 0
    %177 = vmatpush1.bf16.msra.mxu0 0
    %178 = vmatprep.subr.bf16.mxu0 0
    %179 = vmatpush1.bf16.msra.mxu0 0
    %180 = vmatprep.subr.bf16.mxu0 0
    %181 = vmatpush1.bf16.msra.mxu0 0
    %182 = vmatprep.subr.bf16.mxu0 0
    %183 = vmatpush1.bf16.msra.mxu0 0
    %184 = vmatprep.subr.bf16.mxu0 0
    %185 = vmatpush1.bf16.msra.mxu0 0
    %186 = vmatprep.subr.bf16.mxu0 0
    %187 = vmatpush1.bf16.msra.mxu0 0
    %188 = vmatprep.subr.bf16.mxu0 0
    %189 = vmatpush1.bf16.msra.mxu0 0
    %190 = vmatprep.subr.bf16.mxu0 0
    %191 = vmatpush1.bf16.msra.mxu0 0
    %192 = vmatprep.mubr.bf16.mxu0 0
    %193 = vmatmul.mubr.bf16.gmra.mrb[0].mxu0 %v149
    %v194 = vpop.f32.mrb[0].mxu0
    %v195 = vadd.f32 %v70, %v194
    %v196 = vpop.f32.mrb[0].mxu0
    %v197 = vadd.f32 %v74, %v196
    %v198 = vpop.f32.mrb[0].mxu0
    %v199 = vadd.f32 %v70, %v198
    %v200 = vpop.f32.mrb[0].mxu0
    %v201 = vadd.f32 %v74, %v200
    %202 = vmatprep.mubr.bf16.mxu0 0
    %203 = vmatmul.mubr.bf16.gmra.mrb[0].mxu0 %v152
    %v204 = vpop.f32.mrb[0].mxu0
    %v205 = vadd.f32 %v70, %v204
    %v206 = vpop.f32.mrb[0].mxu0
    %v207 = vadd.f32 %v74, %v206
    %v208 = vpop.f32.mrb[0].mxu0
    %v209 = vadd.f32 %v70, %v208
    %v210 = vpop.f32.mrb[0].mxu0
    %v211 = vadd.f32 %v74, %v210
    %212 = vmatprep.mubr.bf16.mxu0 0
    %213 = vmatmul.mubr.bf16.gmra.mrb[0].mxu0 %v155
    %v214 = vpop.f32.mrb[0].mxu0
    %v215 = vadd.f32 %v70, %v214
    %v216 = vpop.f32.mrb[0].mxu0
    %v217 = vadd.f32 %v74, %v216
    %v218 = vpop.f32.mrb[0].mxu0
    %v219 = vadd.f32 %v70, %v218
    %v220 = vpop.f32.mrb[0].mxu0
    %v221 = vadd.f32 %v74, %v220
    %222 = vmatprep.mubr.bf16.mxu0 0
    %223 = vmatmul.mubr.bf16.gmra.mrb[0].mxu0 %v158
    %v224 = vpop.f32.mrb[0].mxu0
    %v225 = vadd.f32 %v70, %v224
    %v226 = vpop.f32.mrb[0].mxu0
    %v227 = vadd.f32 %v74, %v226
    %v228 = vpop.f32.mrb[0].mxu0
    %v229 = vadd.f32 %v70, %v228
    %v230 = vpop.f32.mrb[0].mxu0
    %v231 = vadd.f32 %v74, %v230
    %232 = vdwg.mxu0
    %233 = vmatprep.subr.bf16.mxu0 %v134
    %234 = vmatpush1.bf16.msra.mxu0 %v133
    %235 = vmatprep.subr.bf16.mxu0 %v138
    %236 = vmatpush1.bf16.msra.mxu0 %v137
    %237 = vmatprep.subr.bf16.mxu0 0
    %238 = vmatpush1.bf16.msra.mxu0 0
    %239 = vmatprep.subr.bf16.mxu0 0
    %240 = vmatpush1.bf16.msra.mxu0 0
    %241 = vmatprep.subr.bf16.mxu0 0
    %242 = vmatpush1.bf16.msra.mxu0 0
    %243 = vmatprep.subr.bf16.mxu0 0
    %244 = vmatpush1.bf16.msra.mxu0 0
    %245 = vmatprep.subr.bf16.mxu0 0
    %246 = vmatpush1.bf16.msra.mxu0 0
    %247 = vmatprep.subr.bf16.mxu0 0
    %248 = vmatpush1.bf16.msra.mxu0 0
    %249 = vmatprep.subr.bf16.mxu0 0
    %250 = vmatpush1.bf16.msra.mxu0 0
    %251 = vmatprep.subr.bf16.mxu0 0
    %252 = vmatpush1.bf16.msra.mxu0 0
    %253 = vmatprep.subr.bf16.mxu0 0
    %254 = vmatpush1.bf16.msra.mxu0 0
    %255 = vmatprep.subr.bf16.mxu0 0
    %256 = vmatpush1.bf16.msra.mxu0 0
    %257 = vmatprep.subr.bf16.mxu0 0
    %258 = vmatpush1.bf16.msra.mxu0 0
    %259 = vmatprep.subr.bf16.mxu0 0
    %260 = vmatpush1.bf16.msra.mxu0 0
    %261 = vmatprep.subr.bf16.mxu0 0
    %262 = vmatpush1.bf16.msra.mxu0 0
    %263 = vmatprep.subr.bf16.mxu0 0
    %264 = vmatpush1.bf16.msra.mxu0 0
    %265 = vmatprep.mubr.bf16.mxu0 0
    %266 = vmatmul.mubr.bf16.gmra.mrb[0].mxu0 %v149
    %v267 = vpop.f32.mrb[0].mxu0
    %v268 = vadd.f32 %v78, %v267
    %v269 = vpop.f32.mrb[0].mxu0
    %v270 = vadd.f32 %v82, %v269
    %v271 = vpop.f32.mrb[0].mxu0
    %v272 = vadd.f32 %v78, %v271
    %v273 = vpop.f32.mrb[0].mxu0
    %v274 = vadd.f32 %v82, %v273
    %275 = vmatprep.mubr.bf16.mxu0 0
    %276 = vmatmul.mubr.bf16.gmra.mrb[0].mxu0 %v152
    %v277 = vpop.f32.mrb[0].mxu0
    %v278 = vadd.f32 %v78, %v277
    %v279 = vpop.f32.mrb[0].mxu0
    %v280 = vadd.f32 %v82, %v279
    %v281 = vpop.f32.mrb[0].mxu0
    %v282 = vadd.f32 %v78, %v281
    %v283 = vpop.f32.mrb[0].mxu0
    %v284 = vadd.f32 %v82, %v283
    %285 = vmatprep.mubr.bf16.mxu0 0
    %286 = vmatmul.mubr.bf16.gmra.mrb[0].mxu0 %v155
    %v287 = vpop.f32.mrb[0].mxu0
    %v288 = vadd.f32 %v78, %v287
    %v289 = vpop.f32.mrb[0].mxu0
    %v290 = vadd.f32 %v82, %v289
    %v291 = vpop.f32.mrb[0].mxu0
    %v292 = vadd.f32 %v78, %v291
    %v293 = vpop.f32.mrb[0].mxu0
    %v294 = vadd.f32 %v82, %v293
    %295 = vmatprep.mubr.bf16.mxu0 0
    %296 = vmatmul.mubr.bf16.gmra.mrb[0].mxu0 %v158
    %v297 = vpop.f32.mrb[0].mxu0
    %v298 = vadd.f32 %v78, %v297
    %v299 = vpop.f32.mrb[0].mxu0
    %v300 = vadd.f32 %v82, %v299
    %v301 = vpop.f32.mrb[0].mxu0
    %v302 = vadd.f32 %v78, %v301
    %v303 = vpop.f32.mrb[0].mxu0
    %v304 = vadd.f32 %v82, %v303
    %305 = vdwg.mxu0
    %306 = vst [vmem:[#allocation2] sm:$0xff] %v195
    %307 = vst [vmem:[#allocation2 + $0x8] sm:$0xff] %v197
    %308 = vst [vmem:[#allocation2 + $0x10] sm:$0xff] %v268
    %309 = vst [vmem:[#allocation2 + $0x18] sm:$0xff] %v270
    %310 = vst [vmem:[#allocation2 + $0x20] sm:$0xff] %v199
    %311 = vst [vmem:[#allocation2 + $0x28] sm:$0xff] %v201
    %312 = vst [vmem:[#allocation2 + $0x30] sm:$0xff] %v272
    %313 = vst [vmem:[#allocation2 + $0x38] sm:$0xff] %v274
    %314 = vst [vmem:[#allocation2 + $0x40] sm:$0xff] %v205
    %315 = vst [vmem:[#allocation2 + $0x48] sm:$0xff] %v207
    %316 = vst [vmem:[#allocation2 + $0x50] sm:$0xff] %v278
    %317 = vst [vmem:[#allocation2 + $0x58] sm:$0xff] %v280
    %318 = vst [vmem:[#allocation2 + $0x60] sm:$0xff] %v209
    %319 = vst [vmem:[#allocation2 + $0x68] sm:$0xff] %v211
    %320 = vst [vmem:[#allocation2 + $0x70] sm:$0xff] %v282
    %321 = vst [vmem:[#allocation2 + $0x78] sm:$0xff] %v284
    %322 = vst [vmem:[#allocation2 + $0x80] sm:$0xff] %v215
    %323 = vst [vmem:[#allocation2 + $0x88] sm:$0xff] %v217
    %324 = vst [vmem:[#allocation2 + $0x90] sm:$0xff] %v288
    %325 = vst [vmem:[#allocation2 + $0x98] sm:$0xff] %v290
    %326 = vst [vmem:[#allocation2 + $0xa0] sm:$0xff] %v219
    %327 = vst [vmem:[#allocation2 + $0xa8] sm:$0xff] %v221
    %328 = vst [vmem:[#allocation2 + $0xb0] sm:$0xff] %v292
    %329 = vst [vmem:[#allocation2 + $0xb8] sm:$0xff] %v294
    %330 = vst [vmem:[#allocation2 + $0xc0] sm:$0xff] %v225
    %331 = vst [vmem:[#allocation2 + $0xc8] sm:$0xff] %v227
    %332 = vst [vmem:[#allocation2 + $0xd0] sm:$0xff] %v298
    %333 = vst [vmem:[#allocation2 + $0xd8] sm:$0xff] %v300
    %334 = vst [vmem:[#allocation2 + $0xe0] sm:$0xff] %v229
    %335 = vst [vmem:[#allocation2 + $0xe8] sm:$0xff] %v231
    %336 = vst [vmem:[#allocation2 + $0xf0] sm:$0xff] %v302
    %337 = vst [vmem:[#allocation2 + $0xf8] sm:$0xff] %v304
    %v338 = vld [vmem:[#allocation3] sm:$0xff]
    %v339 = vld [vmem:[#allocation3 + $0x8] sm:$0xff]
    %v340 = vld [vmem:[#allocation3 + $0x10] sm:$0xff]
    %v341 = vld [vmem:[#allocation3 + $0x18] sm:$0xff]
    %v342 = vld [vmem:[#allocation3 + $0x20] sm:$0xff]
    %v343 = vld [vmem:[#allocation3 + $0x28] sm:$0xff]
    %v344 = vld [vmem:[#allocation3 + $0x30] sm:$0xff]
    %v345 = vld [vmem:[#allocation3 + $0x38] sm:$0xff]
    %v346 = vld [vmem:[#allocation3 + $0x40] sm:$0xff]
    %v347 = vld [vmem:[#allocation3 + $0x48] sm:$0xff]
    %v348 = vld [vmem:[#allocation3 + $0x50] sm:$0xff]
    %v349 = vld [vmem:[#allocation3 + $0x58] sm:$0xff]
    %v350 = vld [vmem:[#allocation3 + $0x60] sm:$0xff]
    %v351 = vld [vmem:[#allocation3 + $0x68] sm:$0xff]
    %v352 = vld [vmem:[#allocation3 + $0x70] sm:$0xff]
    %v353 = vld [vmem:[#allocation3 + $0x78] sm:$0xff]
    %v354 = vld [vmem:[#allocation3 + $0x80] sm:$0xff]
    %v355 = vld [vmem:[#allocation3 + $0x88] sm:$0xff]
    %v356 = vld [vmem:[#allocation3 + $0x90] sm:$0xff]
    %v357 = vld [vmem:[#allocation3 + $0x98] sm:$0xff]
    %v358 = vld [vmem:[#allocation3 + $0xa0] sm:$0xff]
    %v359 = vld [vmem:[#allocation3 + $0xa8] sm:$0xff]
    %v360 = vld [vmem:[#allocation3 + $0xb0] sm:$0xff]
    %v361 = vld [vmem:[#allocation3 + $0xb8] sm:$0xff]
    %v362 = vld [vmem:[#allocation3 + $0xc0] sm:$0xff]
    %v363 = vld [vmem:[#allocation3 + $0xc8] sm:$0xff]
    %v364 = vld [vmem:[#allocation3 + $0xd0] sm:$0xff]
    %v365 = vld [vmem:[#allocation3 + $0xd8] sm:$0xff]
    %v366 = vld [vmem:[#allocation3 + $0xe0] sm:$0xff]
    %v367 = vld [vmem:[#allocation3 + $0xe8] sm:$0xff]
    %v368 = vld [vmem:[#allocation3 + $0xf0] sm:$0xff]
    %v369 = vld [vmem:[#allocation3 + $0xf8] sm:$0xff]
    %v370 = vld [vmem:[#allocation2] sm:$0xff]
    %v371 = vld [vmem:[#allocation2 + $0x8] sm:$0xff]
    %v372 = vld [vmem:[#allocation2 + $0x10] sm:$0xff]
    %v373 = vld [vmem:[#allocation2 + $0x18] sm:$0xff]
    %v406 = vunpack.c.l.b16 %v338
    %v407 = vunpack.c.h.b16 %v338
    %v408 = vunpack.c.l.b16 %v339
    %v409 = vunpack.c.h.b16 %v339
    %v410 = vunpack.c.l.b16 %v340
    %v411 = vunpack.c.h.b16 %v340
    %v412 = vunpack.c.l.b16 %v341
    %v413 = vunpack.c.h.b16 %v341
    %v414 = vunpack.c.l.b16 %v342
    %v415 = vunpack.c.h.b16 %v342
    %v416 = vunpack.c.l.b16 %v343
    %v417 = vunpack.c.h.b16 %v343
    %v418 = vunpack.c.l.b16 %v344
    %v419 = vunpack.c.h.b16 %v344
    %v420 = vunpack.c.l.b16 %v345
    %v421 = vunpack.c.h.b16 %v345
    %v422 = vunpack.c.l.b16 %v346
    %v423 = vunpack.c.h.b16 %v346
    %v424 = vunpack.c.l.b16 %v347
    %v425 = vunpack.c.h.b16 %v347
    %v426 = vunpack.c.l.b16 %v348
    %v427 = vunpack.c.h.b16 %v348
    %v428 = vunpack.c.l.b16 %v349
    %v429 = vunpack.c.h.b16 %v349
    %v430 = vunpack.c.l.b16 %v350
    %v431 = vunpack.c.h.b16 %v350
    %v432 = vunpack.c.l.b16 %v351
    %v433 = vunpack.c.h.b16 %v351
    %v434 = vunpack.c.l.b16 %v352
    %v435 = vunpack.c.h.b16 %v352
    %v436 = vunpack.c.l.b16 %v353
    %v437 = vunpack.c.h.b16 %v353
    %v438 = vunpack.c.l.b16 %v354
    %v439 = vunpack.c.h.b16 %v354
    %v440 = vunpack.c.l.b16 %v355
    %v441 = vunpack.c.h.b16 %v355
    %v442 = vunpack.c.l.b16 %v356
    %v443 = vunpack.c.h.b16 %v356
    %v444 = vunpack.c.l.b16 %v357
    %v445 = vunpack.c.h.b16 %v357
    %v446 = vunpack.c.l.b16 %v358
    %v447 = vunpack.c.h.b16 %v358
    %v448 = vunpack.c.l.b16 %v359
    %v449 = vunpack.c.h.b16 %v359
    %v450 = vunpack.c.l.b16 %v360
    %v451 = vunpack.c.h.b16 %v360
    %v452 = vunpack.c.l.b16 %v361
    %v453 = vunpack.c.h.b16 %v361
    %v454 = vunpack.c.l.b16 %v362
    %v455 = vunpack.c.h.b16 %v362
    %v456 = vunpack.c.l.b16 %v363
    %v457 = vunpack.c.h.b16 %v363
    %v458 = vunpack.c.l.b16 %v364
    %v459 = vunpack.c.h.b16 %v364
    %v460 = vunpack.c.l.b16 %v365
    %v461 = vunpack.c.h.b16 %v365
    %v462 = vunpack.c.l.b16 %v366
    %v463 = vunpack.c.h.b16 %v366
    %v464 = vunpack.c.l.b16 %v367
    %v465 = vunpack.c.h.b16 %v367
    %v466 = vunpack.c.l.b16 %v368
    %v467 = vunpack.c.h.b16 %v368
    %v468 = vunpack.c.l.b16 %v369
    %v469 = vunpack.c.h.b16 %v369
    %v470 = vpack.c.b16 %v410, %v406
    %v471 = vpack.c.b16 %v411, %v407
    %v472 = vpack.c.b16 %v412, %v408
    %v473 = vpack.c.b16 %v413, %v409
    %v474 = vpack.c.b16 %v418, %v414
    %v475 = vpack.c.b16 %v419, %v415
    %v476 = vpack.c.b16 %v420, %v416
    %v477 = vpack.c.b16 %v421, %v417
    %v478 = vpack.c.b16 %v426, %v422
    %v479 = vpack.c.b16 %v427, %v423
    %v480 = vpack.c.b16 %v428, %v424
    %v481 = vpack.c.b16 %v429, %v425
    %v482 = vpack.c.b16 %v434, %v430
    %v483 = vpack.c.b16 %v435, %v431
    %v484 = vpack.c.b16 %v436, %v432
    %v485 = vpack.c.b16 %v437, %v433
    %v486 = vpack.c.b16 %v442, %v438
    %v487 = vpack.c.b16 %v443, %v439
    %v488 = vpack.c.b16 %v444, %v440
    %v489 = vpack.c.b16 %v445, %v441
    %v490 = vpack.c.b16 %v450, %v446
    %v491 = vpack.c.b16 %v451, %v447
    %v492 = vpack.c.b16 %v452, %v448
    %v493 = vpack.c.b16 %v453, %v449
    %v494 = vpack.c.b16 %v458, %v454
    %v495 = vpack.c.b16 %v459, %v455
    %v496 = vpack.c.b16 %v460, %v456
    %v497 = vpack.c.b16 %v461, %v457
    %v498 = vpack.c.b16 %v466, %v462
    %v499 = vpack.c.b16 %v467, %v463
    %v500 = vpack.c.b16 %v468, %v464
    %v501 = vpack.c.b16 %v469, %v465
    %534 = vmatprep.subr.bf16.mxu0 %v471
    %535 = vmatpush1.bf16.msra.mxu0 %v470
    %536 = vmatprep.subr.bf16.mxu0 %v475
    %537 = vmatpush1.bf16.msra.mxu0 %v474
    %538 = vmatprep.subr.bf16.mxu0 %v479
    %539 = vmatpush1.bf16.msra.mxu0 %v478
    %540 = vmatprep.subr.bf16.mxu0 %v483
    %541 = vmatpush1.bf16.msra.mxu0 %v482
    %542 = vmatprep.subr.bf16.mxu0 %v487
    %543 = vmatpush1.bf16.msra.mxu0 %v486
    %544 = vmatprep.subr.bf16.mxu0 %v491
    %545 = vmatpush1.bf16.msra.mxu0 %v490
    %546 = vmatprep.subr.bf16.mxu0 %v495
    %547 = vmatpush1.bf16.msra.mxu0 %v494
    %548 = vmatprep.subr.bf16.mxu0 %v499
    %549 = vmatpush1.bf16.msra.mxu0 %v498
    %550 = vmatprep.subr.bf16.mxu0 0
    %551 = vmatpush1.bf16.msra.mxu0 0
    %552 = vmatprep.subr.bf16.mxu0 0
    %553 = vmatpush1.bf16.msra.mxu0 0
    %554 = vmatprep.subr.bf16.mxu0 0
    %555 = vmatpush1.bf16.msra.mxu0 0
    %556 = vmatprep.subr.bf16.mxu0 0
    %557 = vmatpush1.bf16.msra.mxu0 0
    %558 = vmatprep.subr.bf16.mxu0 0
    %559 = vmatpush1.bf16.msra.mxu0 0
    %560 = vmatprep.subr.bf16.mxu0 0
    %561 = vmatpush1.bf16.msra.mxu0 0
    %562 = vmatprep.subr.bf16.mxu0 0
    %563 = vmatpush1.bf16.msra.mxu0 0
    %564 = vmatprep.subr.bf16.mxu0 0
    %565 = vmatpush1.bf16.msra.mxu0 0
    %566 = vmatprep.mubr.bf16.mxu0 0
    %567 = vmatmul.mubr.bf16.gmra.mrb[0].mxu0 0
    %v568 = vpop.f32.mrb[0].mxu0
    %v569 = vadd.f32 %v370, %v568
    %v570 = vpop.f32.mrb[0].mxu0
    %v571 = vadd.f32 %v371, %v570
    %v572 = vpop.f32.mrb[0].mxu0
    %v573 = vpop.f32.mrb[0].mxu0
    %574 = vdwg.mxu0
    %575 = vmatprep.subr.bf16.mxu0 %v473
    %576 = vmatpush1.bf16.msra.mxu0 %v472
    %577 = vmatprep.subr.bf16.mxu0 %v477
    %578 = vmatpush1.bf16.msra.mxu0 %v476
    %579 = vmatprep.subr.bf16.mxu0 %v481
    %580 = vmatpush1.bf16.msra.mxu0 %v480
    %581 = vmatprep.subr.bf16.mxu0 %v485
    %582 = vmatpush1.bf16.msra.mxu0 %v484
    %583 = vmatprep.subr.bf16.mxu0 %v489
    %584 = vmatpush1.bf16.msra.mxu0 %v488
    %585 = vmatprep.subr.bf16.mxu0 %v493
    %586 = vmatpush1.bf16.msra.mxu0 %v492
    %587 = vmatprep.subr.bf16.mxu0 %v497
    %588 = vmatpush1.bf16.msra.mxu0 %v496
    %589 = vmatprep.subr.bf16.mxu0 %v501
    %590 = vmatpush1.bf16.msra.mxu0 %v500
    %591 = vmatprep.subr.bf16.mxu0 0
    %592 = vmatpush1.bf16.msra.mxu0 0
    %593 = vmatprep.subr.bf16.mxu0 0
    %594 = vmatpush1.bf16.msra.mxu0 0
    %595 = vmatprep.subr.bf16.mxu0 0
    %596 = vmatpush1.bf16.msra.mxu0 0
    %597 = vmatprep.subr.bf16.mxu0 0
    %598 = vmatpush1.bf16.msra.mxu0 0
    %599 = vmatprep.subr.bf16.mxu0 0
    %600 = vmatpush1.bf16.msra.mxu0 0
    %601 = vmatprep.subr.bf16.mxu0 0
    %602 = vmatpush1.bf16.msra.mxu0 0
    %603 = vmatprep.subr.bf16.mxu0 0
    %604 = vmatpush1.bf16.msra.mxu0 0
    %605 = vmatprep.subr.bf16.mxu0 0
    %606 = vmatpush1.bf16.msra.mxu0 0
    %607 = vmatprep.mubr.bf16.mxu0 0
    %608 = vmatmul.mubr.bf16.gmra.mrb[0].mxu0 0
    %v609 = vpop.f32.mrb[0].mxu0
    %v610 = vadd.f32 %v372, %v609
    %v611 = vpop.f32.mrb[0].mxu0
    %v612 = vadd.f32 %v373, %v611
    %v613 = vpop.f32.mrb[0].mxu0
    %v614 = vpop.f32.mrb[0].mxu0
    %615 = vdwg.mxu0
    %v616 = vxor.u32 %v569, 2147483648
    %v617 = vxor.u32 %v571, 2147483648
    %v618 = vxor.u32 %v610, 2147483648
    %v619 = vxor.u32 %v612, 2147483648
    %v620 = vmul.f32 %v616, 1.442695
    %v621 = vpow.pop %v620
    %v622 = vmul.f32 %v617, 1.442695
    %v623 = vpow.pop %v622
    %v624 = vmul.f32 %v618, 1.442695
    %v625 = vpow.pop %v624
    %v626 = vmul.f32 %v619, 1.442695
    %v627 = vpow.pop %v626
    %v628 = vadd.f32 %v621, 1.0
    %v629 = vadd.f32 %v623, 1.0
    %v630 = vadd.f32 %v625, 1.0
    %v631 = vadd.f32 %v627, 1.0
    %v632 = vrcp.pop %v628
    %v633 = vmul.f32 1.0, %v632
    %v634 = vrcp.pop %v629
    %v635 = vmul.f32 1.0, %v634
    %v636 = vrcp.pop %v630
    %v637 = vmul.f32 1.0, %v636
    %v638 = vrcp.pop %v631
    %v639 = vmul.f32 1.0, %v638
    %v640 = vmul.f32 %v637, 2.0
    %v641 = vsub.f32 %v640, 1.0
    %v642 = vmul.f32 %v635, 0.0
    %v643 = vmul.f32 %v633, %v641
    %v644 = vadd.f32 %v642, %v643
    %v645 = vtanh.pop %v644
    %v646 = vmul.f32 %v639, %v645
    %v647 = vpack.c.bf16 %v646, %v646
    %s648 = scalar_lea.vmem [#allocation2], 32
    %v649 = vld [vmem:[%s648] sm:$0xff]
    %v650 = vld [vmem:[%s648 + $0x8] sm:$0xff]
    %v651 = vld [vmem:[%s648 + $0x10] sm:$0xff]
    %v652 = vld [vmem:[%s648 + $0x18] sm:$0xff]
    %653 = vmatprep.subr.bf16.mxu0 %v471
    %654 = vmatpush1.bf16.msra.mxu0 %v470
    %655 = vmatprep.subr.bf16.mxu0 %v475
    %656 = vmatpush1.bf16.msra.mxu0 %v474
    %657 = vmatprep.subr.bf16.mxu0 %v479
    %658 = vmatpush1.bf16.msra.mxu0 %v478
    %659 = vmatprep.subr.bf16.mxu0 %v483
    %660 = vmatpush1.bf16.msra.mxu0 %v482
    %661 = vmatprep.subr.bf16.mxu0 %v487
    %662 = vmatpush1.bf16.msra.mxu0 %v486
    %663 = vmatprep.subr.bf16.mxu0 %v491
    %664 = vmatpush1.bf16.msra.mxu0 %v490
    %665 = vmatprep.subr.bf16.mxu0 %v495
    %666 = vmatpush1.bf16.msra.mxu0 %v494
    %667 = vmatprep.subr.bf16.mxu0 %v499
    %668 = vmatpush1.bf16.msra.mxu0 %v498
    %669 = vmatprep.subr.bf16.mxu0 0
    %670 = vmatpush1.bf16.msra.mxu0 0
    %671 = vmatprep.subr.bf16.mxu0 0
    %672 = vmatpush1.bf16.msra.mxu0 0
    %673 = vmatprep.subr.bf16.mxu0 0
    %674 = vmatpush1.bf16.msra.mxu0 0
    %675 = vmatprep.subr.bf16.mxu0 0
    %676 = vmatpush1.bf16.msra.mxu0 0
    %677 = vmatprep.subr.bf16.mxu0 0
    %678 = vmatpush1.bf16.msra.mxu0 0
    %679 = vmatprep.subr.bf16.mxu0 0
    %680 = vmatpush1.bf16.msra.mxu0 0
    %681 = vmatprep.subr.bf16.mxu0 0
    %682 = vmatpush1.bf16.msra.mxu0 0
    %683 = vmatprep.subr.bf16.mxu0 0
    %684 = vmatpush1.bf16.msra.mxu0 0
    %685 = vmatprep.mubr.bf16.mxu0 0
    %686 = vmatmul.mubr.bf16.gmra.mrb[0].mxu0 %v647
    %v687 = vpop.f32.mrb[0].mxu0
    %v688 = vadd.f32 %v649, %v687
    %v689 = vpop.f32.mrb[0].mxu0
    %v690 = vadd.f32 %v650, %v689
    %v691 = vpop.f32.mrb[0].mxu0
    %v692 = vpop.f32.mrb[0].mxu0
    %693 = vdwg.mxu0
    %694 = vmatprep.subr.bf16.mxu0 %v473
    %695 = vmatpush1.bf16.msra.mxu0 %v472
    %696 = vmatprep.subr.bf16.mxu0 %v477
    %697 = vmatpush1.bf16.msra.mxu0 %v476
    %698 = vmatprep.subr.bf16.mxu0 %v481
    %699 = vmatpush1.bf16.msra.mxu0 %v480
    %700 = vmatprep.subr.bf16.mxu0 %v485
    %701 = vmatpush1.bf16.msra.mxu0 %v484
    %702 = vmatprep.subr.bf16.mxu0 %v489
    %703 = vmatpush1.bf16.msra.mxu0 %v488
    %704 = vmatprep.subr.bf16.mxu0 %v493
    %705 = vmatpush1.bf16.msra.mxu0 %v492
    %706 = vmatprep.subr.bf16.mxu0 %v497
    %707 = vmatpush1.bf16.msra.mxu0 %v496
    %708 = vmatprep.subr.bf16.mxu0 %v501
    %709 = vmatpush1.bf16.msra.mxu0 %v500
    %710 = vmatprep.subr.bf16.mxu0 0
    %711 = vmatpush1.bf16.msra.mxu0 0
    %712 = vmatprep.subr.bf16.mxu0 0
    %713 = vmatpush1.bf16.msra.mxu0 0
    %714 = vmatprep.subr.bf16.mxu0 0
    %715 = vmatpush1.bf16.msra.mxu0 0
    %716 = vmatprep.subr.bf16.mxu0 0
    %717 = vmatpush1.bf16.msra.mxu0 0
    %718 = vmatprep.subr.bf16.mxu0 0
    %719 = vmatpush1.bf16.msra.mxu0 0
    %720 = vmatprep.subr.bf16.mxu0 0
    %721 = vmatpush1.bf16.msra.mxu0 0
    %722 = vmatprep.subr.bf16.mxu0 0
    %723 = vmatpush1.bf16.msra.mxu0 0
    %724 = vmatprep.subr.bf16.mxu0 0
    %725 = vmatpush1.bf16.msra.mxu0 0
    %726 = vmatprep.mubr.bf16.mxu0 0
    %727 = vmatmul.mubr.bf16.gmra.mrb[0].mxu0 %v647
    %v728 = vpop.f32.mrb[0].mxu0
    %v729 = vadd.f32 %v651, %v728
    %v730 = vpop.f32.mrb[0].mxu0
    %v731 = vadd.f32 %v652, %v730
    %v732 = vpop.f32.mrb[0].mxu0
    %v733 = vpop.f32.mrb[0].mxu0
    %734 = vdwg.mxu0
    %v735 = vxor.u32 %v688, 2147483648
    %v736 = vxor.u32 %v690, 2147483648
    %v737 = vxor.u32 %v729, 2147483648
    %v738 = vxor.u32 %v731, 2147483648
    %v739 = vmul.f32 %v735, 1.442695
    %v740 = vpow.pop %v739
    %v741 = vmul.f32 %v736, 1.442695
    %v742 = vpow.pop %v741
    %v743 = vmul.f32 %v737, 1.442695
    %v744 = vpow.pop %v743
    %v745 = vmul.f32 %v738, 1.442695
    %v746 = vpow.pop %v745
    %v747 = vadd.f32 %v740, 1.0
    %v748 = vadd.f32 %v742, 1.0
    %v749 = vadd.f32 %v744, 1.0
    %v750 = vadd.f32 %v746, 1.0
    %v751 = vrcp.pop %v747
    %v752 = vmul.f32 1.0, %v751
    %v753 = vrcp.pop %v748
    %v754 = vmul.f32 1.0, %v753
    %v755 = vrcp.pop %v749
    %v756 = vmul.f32 1.0, %v755
    %v757 = vrcp.pop %v750
    %v758 = vmul.f32 1.0, %v757
    %v759 = vmul.f32 %v756, 2.0
    %v760 = vsub.f32 %v759, 1.0
    %v761 = vmul.f32 %v754, %v644
    %v762 = vmul.f32 %v752, %v760
    %v763 = vadd.f32 %v761, %v762
    %v764 = vtanh.pop %v763
    %v765 = vmul.f32 %v758, %v764
    %v766 = vpack.c.bf16 %v765, %v765
    %s767 = scalar_lea.vmem [#allocation2], 64
    %v768 = vld [vmem:[%s767] sm:$0xff]
    %v769 = vld [vmem:[%s767 + $0x8] sm:$0xff]
    %v770 = vld [vmem:[%s767 + $0x10] sm:$0xff]
    %v771 = vld [vmem:[%s767 + $0x18] sm:$0xff]
    %772 = vmatprep.subr.bf16.mxu0 %v471
    %773 = vmatpush1.bf16.msra.mxu0 %v470
    %774 = vmatprep.subr.bf16.mxu0 %v475
    %775 = vmatpush1.bf16.msra.mxu0 %v474
    %776 = vmatprep.subr.bf16.mxu0 %v479
    %777 = vmatpush1.bf16.msra.mxu0 %v478
    %778 = vmatprep.subr.bf16.mxu0 %v483
    %779 = vmatpush1.bf16.msra.mxu0 %v482
    %780 = vmatprep.subr.bf16.mxu0 %v487
    %781 = vmatpush1.bf16.msra.mxu0 %v486
    %782 = vmatprep.subr.bf16.mxu0 %v491
    %783 = vmatpush1.bf16.msra.mxu0 %v490
    %784 = vmatprep.subr.bf16.mxu0 %v495
    %785 = vmatpush1.bf16.msra.mxu0 %v494
    %786 = vmatprep.subr.bf16.mxu0 %v499
    %787 = vmatpush1.bf16.msra.mxu0 %v498
    %788 = vmatprep.subr.bf16.mxu0 0
    %789 = vmatpush1.bf16.msra.mxu0 0
    %790 = vmatprep.subr.bf16.mxu0 0
    %791 = vmatpush1.bf16.msra.mxu0 0
    %792 = vmatprep.subr.bf16.mxu0 0
    %793 = vmatpush1.bf16.msra.mxu0 0
    %794 = vmatprep.subr.bf16.mxu0 0
    %795 = vmatpush1.bf16.msra.mxu0 0
    %796 = vmatprep.subr.bf16.mxu0 0
    %797 = vmatpush1.bf16.msra.mxu0 0
    %798 = vmatprep.subr.bf16.mxu0 0
    %799 = vmatpush1.bf16.msra.mxu0 0
    %800 = vmatprep.subr.bf16.mxu0 0
    %801 = vmatpush1.bf16.msra.mxu0 0
    %802 = vmatprep.subr.bf16.mxu0 0
    %803 = vmatpush1.bf16.msra.mxu0 0
    %804 = vmatprep.mubr.bf16.mxu0 0
    %805 = vmatmul.mubr.bf16.gmra.mrb[0].mxu0 %v766
    %v806 = vpop.f32.mrb[0].mxu0
    %v807 = vadd.f32 %v768, %v806
    %v808 = vpop.f32.mrb[0].mxu0
    %v809 = vadd.f32 %v769, %v808
    %v810 = vpop.f32.mrb[0].mxu0
    %v811 = vpop.f32.mrb[0].mxu0
    %812 = vdwg.mxu0
    %813 = vmatprep.subr.bf16.mxu0 %v473
    %814 = vmatpush1.bf16.msra.mxu0 %v472
    %815 = vmatprep.subr.bf16.mxu0 %v477
    %816 = vmatpush1.bf16.msra.mxu0 %v476
    %817 = vmatprep.subr.bf16.mxu0 %v481
    %818 = vmatpush1.bf16.msra.mxu0 %v480
    %819 = vmatprep.subr.bf16.mxu0 %v485
    %820 = vmatpush1.bf16.msra.mxu0 %v484
    %821 = vmatprep.subr.bf16.mxu0 %v489
    %822 = vmatpush1.bf16.msra.mxu0 %v488
    %823 = vmatprep.subr.bf16.mxu0 %v493
    %824 = vmatpush1.bf16.msra.mxu0 %v492
    %825 = vmatprep.subr.bf16.mxu0 %v497
    %826 = vmatpush1.bf16.msra.mxu0 %v496
    %827 = vmatprep.subr.bf16.mxu0 %v501
    %828 = vmatpush1.bf16.msra.mxu0 %v500
    %829 = vmatprep.subr.bf16.mxu0 0
    %830 = vmatpush1.bf16.msra.mxu0 0
    %831 = vmatprep.subr.bf16.mxu0 0
    %832 = vmatpush1.bf16.msra.mxu0 0
    %833 = vmatprep.subr.bf16.mxu0 0
    %834 = vmatpush1.bf16.msra.mxu0 0
    %835 = vmatprep.subr.bf16.mxu0 0
    %836 = vmatpush1.bf16.msra.mxu0 0
    %837 = vmatprep.subr.bf16.mxu0 0
    %838 = vmatpush1.bf16.msra.mxu0 0
    %839 = vmatprep.subr.bf16.mxu0 0
    %840 = vmatpush1.bf16.msra.mxu0 0
    %841 = vmatprep.subr.bf16.mxu0 0
    %842 = vmatpush1.bf16.msra.mxu0 0
    %843 = vmatprep.subr.bf16.mxu0 0
    %844 = vmatpush1.bf16.msra.mxu0 0
    %845 = vmatprep.mubr.bf16.mxu0 0
    %846 = vmatmul.mubr.bf16.gmra.mrb[0].mxu0 %v766
    %v847 = vpop.f32.mrb[0].mxu0
    %v848 = vadd.f32 %v770, %v847
    %v849 = vpop.f32.mrb[0].mxu0
    %v850 = vadd.f32 %v771, %v849
    %v851 = vpop.f32.mrb[0].mxu0
    %v852 = vpop.f32.mrb[0].mxu0
    %853 = vdwg.mxu0
    %v854 = vxor.u32 %v807, 2147483648
    %v855 = vxor.u32 %v809, 2147483648
    %v856 = vxor.u32 %v848, 2147483648
    %v857 = vxor.u32 %v850, 2147483648
    %v858 = vmul.f32 %v854, 1.442695
    %v859 = vpow.pop %v858
    %v860 = vmul.f32 %v855, 1.442695
    %v861 = vpow.pop %v860
    %v862 = vmul.f32 %v856, 1.442695
    %v863 = vpow.pop %v862
    %v864 = vmul.f32 %v857, 1.442695
    %v865 = vpow.pop %v864
    %v866 = vadd.f32 %v859, 1.0
    %v867 = vadd.f32 %v861, 1.0
    %v868 = vadd.f32 %v863, 1.0
    %v869 = vadd.f32 %v865, 1.0
    %v870 = vrcp.pop %v866
    %v871 = vmul.f32 1.0, %v870
    %v872 = vrcp.pop %v867
    %v873 = vmul.f32 1.0, %v872
    %v874 = vrcp.pop %v868
    %v875 = vmul.f32 1.0, %v874
    %v876 = vrcp.pop %v869
    %v877 = vmul.f32 1.0, %v876
    %v878 = vmul.f32 %v875, 2.0
    %v879 = vsub.f32 %v878, 1.0
    %v880 = vmul.f32 %v873, %v763
    %v881 = vmul.f32 %v871, %v879
    %v882 = vadd.f32 %v880, %v881
    %v883 = vtanh.pop %v882
    %v884 = vmul.f32 %v877, %v883
    %v885 = vpack.c.bf16 %v884, %v884
    %s886 = scalar_lea.vmem [#allocation2], 96
    %v887 = vld [vmem:[%s886] sm:$0xff]
    %v888 = vld [vmem:[%s886 + $0x8] sm:$0xff]
    %v889 = vld [vmem:[%s886 + $0x10] sm:$0xff]
    %v890 = vld [vmem:[%s886 + $0x18] sm:$0xff]
    %891 = vmatprep.subr.bf16.mxu0 %v471
    %892 = vmatpush1.bf16.msra.mxu0 %v470
    %893 = vmatprep.subr.bf16.mxu0 %v475
    %894 = vmatpush1.bf16.msra.mxu0 %v474
    %895 = vmatprep.subr.bf16.mxu0 %v479
    %896 = vmatpush1.bf16.msra.mxu0 %v478
    %897 = vmatprep.subr.bf16.mxu0 %v483
    %898 = vmatpush1.bf16.msra.mxu0 %v482
    %899 = vmatprep.subr.bf16.mxu0 %v487
    %900 = vmatpush1.bf16.msra.mxu0 %v486
    %901 = vmatprep.subr.bf16.mxu0 %v491
    %902 = vmatpush1.bf16.msra.mxu0 %v490
    %903 = vmatprep.subr.bf16.mxu0 %v495
    %904 = vmatpush1.bf16.msra.mxu0 %v494
    %905 = vmatprep.subr.bf16.mxu0 %v499
    %906 = vmatpush1.bf16.msra.mxu0 %v498
    %907 = vmatprep.subr.bf16.mxu0 0
    %908 = vmatpush1.bf16.msra.mxu0 0
    %909 = vmatprep.subr.bf16.mxu0 0
    %910 = vmatpush1.bf16.msra.mxu0 0
    %911 = vmatprep.subr.bf16.mxu0 0
    %912 = vmatpush1.bf16.msra.mxu0 0
    %913 = vmatprep.subr.bf16.mxu0 0
    %914 = vmatpush1.bf16.msra.mxu0 0
    %915 = vmatprep.subr.bf16.mxu0 0
    %916 = vmatpush1.bf16.msra.mxu0 0
    %917 = vmatprep.subr.bf16.mxu0 0
    %918 = vmatpush1.bf16.msra.mxu0 0
    %919 = vmatprep.subr.bf16.mxu0 0
    %920 = vmatpush1.bf16.msra.mxu0 0
    %921 = vmatprep.subr.bf16.mxu0 0
    %922 = vmatpush1.bf16.msra.mxu0 0
    %923 = vmatprep.mubr.bf16.mxu0 0
    %924 = vmatmul.mubr.bf16.gmra.mrb[0].mxu0 %v885
    %v925 = vpop.f32.mrb[0].mxu0
    %v926 = vadd.f32 %v887, %v925
    %v927 = vpop.f32.mrb[0].mxu0
    %v928 = vadd.f32 %v888, %v927
    %v929 = vpop.f32.mrb[0].mxu0
    %v930 = vpop.f32.mrb[0].mxu0
    %931 = vdwg.mxu0
    %932 = vmatprep.subr.bf16.mxu0 %v473
    %933 = vmatpush1.bf16.msra.mxu0 %v472
    %934 = vmatprep.subr.bf16.mxu0 %v477
    %935 = vmatpush1.bf16.msra.mxu0 %v476
    %936 = vmatprep.subr.bf16.mxu0 %v481
    %937 = vmatpush1.bf16.msra.mxu0 %v480
    %938 = vmatprep.subr.bf16.mxu0 %v485
    %939 = vmatpush1.bf16.msra.mxu0 %v484
    %940 = vmatprep.subr.bf16.mxu0 %v489
    %941 = vmatpush1.bf16.msra.mxu0 %v488
    %942 = vmatprep.subr.bf16.mxu0 %v493
    %943 = vmatpush1.bf16.msra.mxu0 %v492
    %944 = vmatprep.subr.bf16.mxu0 %v497
    %945 = vmatpush1.bf16.msra.mxu0 %v496
    %946 = vmatprep.subr.bf16.mxu0 %v501
    %947 = vmatpush1.bf16.msra.mxu0 %v500
    %948 = vmatprep.subr.bf16.mxu0 0
    %949 = vmatpush1.bf16.msra.mxu0 0
    %950 = vmatprep.subr.bf16.mxu0 0
    %951 = vmatpush1.bf16.msra.mxu0 0
    %952 = vmatprep.subr.bf16.mxu0 0
    %953 = vmatpush1.bf16.msra.mxu0 0
    %954 = vmatprep.subr.bf16.mxu0 0
    %955 = vmatpush1.bf16.msra.mxu0 0
    %956 = vmatprep.subr.bf16.mxu0 0
    %957 = vmatpush1.bf16.msra.mxu0 0
    %958 = vmatprep.subr.bf16.mxu0 0
    %959 = vmatpush1.bf16.msra.mxu0 0
    %960 = vmatprep.subr.bf16.mxu0 0
    %961 = vmatpush1.bf16.msra.mxu0 0
    %962 = vmatprep.subr.bf16.mxu0 0
    %963 = vmatpush1.bf16.msra.mxu0 0
    %964 = vmatprep.mubr.bf16.mxu0 0
    %965 = vmatmul.mubr.bf16.gmra.mrb[0].mxu0 %v885
    %v966 = vpop.f32.mrb[0].mxu0
    %v967 = vadd.f32 %v889, %v966
    %v968 = vpop.f32.mrb[0].mxu0
    %v969 = vadd.f32 %v890, %v968
    %v970 = vpop.f32.mrb[0].mxu0
    %v971 = vpop.f32.mrb[0].mxu0
    %972 = vdwg.mxu0
    %v973 = vxor.u32 %v926, 2147483648
    %v974 = vxor.u32 %v928, 2147483648
    %v975 = vxor.u32 %v967, 2147483648
    %v976 = vxor.u32 %v969, 2147483648
    %v977 = vmul.f32 %v973, 1.442695
    %v978 = vpow.pop %v977
    %v979 = vmul.f32 %v974, 1.442695
    %v980 = vpow.pop %v979
    %v981 = vmul.f32 %v975, 1.442695
    %v982 = vpow.pop %v981
    %v983 = vmul.f32 %v976, 1.442695
    %v984 = vpow.pop %v983
    %v985 = vadd.f32 %v978, 1.0
    %v986 = vadd.f32 %v980, 1.0
    %v987 = vadd.f32 %v982, 1.0
    %v988 = vadd.f32 %v984, 1.0
    %v989 = vrcp.pop %v985
    %v990 = vmul.f32 1.0, %v989
    %v991 = vrcp.pop %v986
    %v992 = vmul.f32 1.0, %v991
    %v993 = vrcp.pop %v987
    %v994 = vmul.f32 1.0, %v993
    %v995 = vrcp.pop %v988
    %v996 = vmul.f32 1.0, %v995
    %v997 = vmul.f32 %v994, 2.0
    %v998 = vsub.f32 %v997, 1.0
    %v999 = vmul.f32 %v992, %v882
    %v1000 = vmul.f32 %v990, %v998
    %v1001 = vadd.f32 %v999, %v1000
    %v1002 = vtanh.pop %v1001
    %v1003 = vmul.f32 %v996, %v1002
    %v1004 = vpack.c.bf16 %v1003, %v1003
    %s1005 = scalar_lea.vmem [#allocation2], 128
    %v1006 = vld [vmem:[%s1005] sm:$0xff]
    %v1007 = vld [vmem:[%s1005 + $0x8] sm:$0xff]
    %v1008 = vld [vmem:[%s1005 + $0x10] sm:$0xff]
    %v1009 = vld [vmem:[%s1005 + $0x18] sm:$0xff]
    %1010 = vmatprep.subr.bf16.mxu0 %v471
    %1011 = vmatpush1.bf16.msra.mxu0 %v470
    %1012 = vmatprep.subr.bf16.mxu0 %v475
    %1013 = vmatpush1.bf16.msra.mxu0 %v474
    %1014 = vmatprep.subr.bf16.mxu0 %v479
    %1015 = vmatpush1.bf16.msra.mxu0 %v478
    %1016 = vmatprep.subr.bf16.mxu0 %v483
    %1017 = vmatpush1.bf16.msra.mxu0 %v482
    %1018 = vmatprep.subr.bf16.mxu0 %v487
    %1019 = vmatpush1.bf16.msra.mxu0 %v486
    %1020 = vmatprep.subr.bf16.mxu0 %v491
    %1021 = vmatpush1.bf16.msra.mxu0 %v490
    %1022 = vmatprep.subr.bf16.mxu0 %v495
    %1023 = vmatpush1.bf16.msra.mxu0 %v494
    %1024 = vmatprep.subr.bf16.mxu0 %v499
    %1025 = vmatpush1.bf16.msra.mxu0 %v498
    %1026 = vmatprep.subr.bf16.mxu0 0
    %1027 = vmatpush1.bf16.msra.mxu0 0
    %1028 = vmatprep.subr.bf16.mxu0 0
    %1029 = vmatpush1.bf16.msra.mxu0 0
    %1030 = vmatprep.subr.bf16.mxu0 0
    %1031 = vmatpush1.bf16.msra.mxu0 0
    %1032 = vmatprep.subr.bf16.mxu0 0
    %1033 = vmatpush1.bf16.msra.mxu0 0
    %1034 = vmatprep.subr.bf16.mxu0 0
    %1035 = vmatpush1.bf16.msra.mxu0 0
    %1036 = vmatprep.subr.bf16.mxu0 0
    %1037 = vmatpush1.bf16.msra.mxu0 0
    %1038 = vmatprep.subr.bf16.mxu0 0
    %1039 = vmatpush1.bf16.msra.mxu0 0
    %1040 = vmatprep.subr.bf16.mxu0 0
    %1041 = vmatpush1.bf16.msra.mxu0 0
    %1042 = vmatprep.mubr.bf16.mxu0 0
    %1043 = vmatmul.mubr.bf16.gmra.mrb[0].mxu0 %v1004
    %v1044 = vpop.f32.mrb[0].mxu0
    %v1045 = vadd.f32 %v1006, %v1044
    %v1046 = vpop.f32.mrb[0].mxu0
    %v1047 = vadd.f32 %v1007, %v1046
    %v1048 = vpop.f32.mrb[0].mxu0
    %v1049 = vpop.f32.mrb[0].mxu0
    %1050 = vdwg.mxu0
    %1051 = vmatprep.subr.bf16.mxu0 %v473
    %1052 = vmatpush1.bf16.msra.mxu0 %v472
    %1053 = vmatprep.subr.bf16.mxu0 %v477
    %1054 = vmatpush1.bf16.msra.mxu0 %v476
    %1055 = vmatprep.subr.bf16.mxu0 %v481
    %1056 = vmatpush1.bf16.msra.mxu0 %v480
    %1057 = vmatprep.subr.bf16.mxu0 %v485
    %1058 = vmatpush1.bf16.msra.mxu0 %v484
    %1059 = vmatprep.subr.bf16.mxu0 %v489
    %1060 = vmatpush1.bf16.msra.mxu0 %v488
    %1061 = vmatprep.subr.bf16.mxu0 %v493
    %1062 = vmatpush1.bf16.msra.mxu0 %v492
    %1063 = vmatprep.subr.bf16.mxu0 %v497
    %1064 = vmatpush1.bf16.msra.mxu0 %v496
    %1065 = vmatprep.subr.bf16.mxu0 %v501
    %1066 = vmatpush1.bf16.msra.mxu0 %v500
    %1067 = vmatprep.subr.bf16.mxu0 0
    %1068 = vmatpush1.bf16.msra.mxu0 0
    %1069 = vmatprep.subr.bf16.mxu0 0
    %1070 = vmatpush1.bf16.msra.mxu0 0
    %1071 = vmatprep.subr.bf16.mxu0 0
    %1072 = vmatpush1.bf16.msra.mxu0 0
    %1073 = vmatprep.subr.bf16.mxu0 0
    %1074 = vmatpush1.bf16.msra.mxu0 0
    %1075 = vmatprep.subr.bf16.mxu0 0
    %1076 = vmatpush1.bf16.msra.mxu0 0
    %1077 = vmatprep.subr.bf16.mxu0 0
    %1078 = vmatpush1.bf16.msra.mxu0 0
    %1079 = vmatprep.subr.bf16.mxu0 0
    %1080 = vmatpush1.bf16.msra.mxu0 0
    %1081 = vmatprep.subr.bf16.mxu0 0
    %1082 = vmatpush1.bf16.msra.mxu0 0
    %1083 = vmatprep.mubr.bf16.mxu0 0
    %1084 = vmatmul.mubr.bf16.gmra.mrb[0].mxu0 %v1004
    %v1085 = vpop.f32.mrb[0].mxu0
    %v1086 = vadd.f32 %v1008, %v1085
    %v1087 = vpop.f32.mrb[0].mxu0
    %v1088 = vadd.f32 %v1009, %v1087
    %v1089 = vpop.f32.mrb[0].mxu0
    %v1090 = vpop.f32.mrb[0].mxu0
    %1091 = vdwg.mxu0
    %v1092 = vxor.u32 %v1045, 2147483648
    %v1093 = vxor.u32 %v1047, 2147483648
    %v1094 = vxor.u32 %v1086, 2147483648
    %v1095 = vxor.u32 %v1088, 2147483648
    %v1096 = vmul.f32 %v1092, 1.442695
    %v1097 = vpow.pop %v1096
    %v1098 = vmul.f32 %v1093, 1.442695
    %v1099 = vpow.pop %v1098
    %v1100 = vmul.f32 %v1094, 1.442695
    %v1101 = vpow.pop %v1100
    %v1102 = vmul.f32 %v1095, 1.442695
    %v1103 = vpow.pop %v1102
    %v1104 = vadd.f32 %v1097, 1.0
    %v1105 = vadd.f32 %v1099, 1.0
    %v1106 = vadd.f32 %v1101, 1.0
    %v1107 = vadd.f32 %v1103, 1.0
    %v1108 = vrcp.pop %v1104
    %v1109 = vmul.f32 1.0, %v1108
    %v1110 = vrcp.pop %v1105
    %v1111 = vmul.f32 1.0, %v1110
    %v1112 = vrcp.pop %v1106
    %v1113 = vmul.f32 1.0, %v1112
    %v1114 = vrcp.pop %v1107
    %v1115 = vmul.f32 1.0, %v1114
    %v1116 = vmul.f32 %v1113, 2.0
    %v1117 = vsub.f32 %v1116, 1.0
    %v1118 = vmul.f32 %v1111, %v1001
    %v1119 = vmul.f32 %v1109, %v1117
    %v1120 = vadd.f32 %v1118, %v1119
    %v1121 = vtanh.pop %v1120
    %v1122 = vmul.f32 %v1115, %v1121
    %v1123 = vpack.c.bf16 %v1122, %v1122
    %s1124 = scalar_lea.vmem [#allocation2], 160
    %v1125 = vld [vmem:[%s1124] sm:$0xff]
    %v1126 = vld [vmem:[%s1124 + $0x8] sm:$0xff]
    %v1127 = vld [vmem:[%s1124 + $0x10] sm:$0xff]
    %v1128 = vld [vmem:[%s1124 + $0x18] sm:$0xff]
    %1129 = vmatprep.subr.bf16.mxu0 %v471
    %1130 = vmatpush1.bf16.msra.mxu0 %v470
    %1131 = vmatprep.subr.bf16.mxu0 %v475
    %1132 = vmatpush1.bf16.msra.mxu0 %v474
    %1133 = vmatprep.subr.bf16.mxu0 %v479
    %1134 = vmatpush1.bf16.msra.mxu0 %v478
    %1135 = vmatprep.subr.bf16.mxu0 %v483
    %1136 = vmatpush1.bf16.msra.mxu0 %v482
    %1137 = vmatprep.subr.bf16.mxu0 %v487
    %1138 = vmatpush1.bf16.msra.mxu0 %v486
    %1139 = vmatprep.subr.bf16.mxu0 %v491
    %1140 = vmatpush1.bf16.msra.mxu0 %v490
    %1141 = vmatprep.subr.bf16.mxu0 %v495
    %1142 = vmatpush1.bf16.msra.mxu0 %v494
    %1143 = vmatprep.subr.bf16.mxu0 %v499
    %1144 = vmatpush1.bf16.msra.mxu0 %v498
    %1145 = vmatprep.subr.bf16.mxu0 0
    %1146 = vmatpush1.bf16.msra.mxu0 0
    %1147 = vmatprep.subr.bf16.mxu0 0
    %1148 = vmatpush1.bf16.msra.mxu0 0
    %1149 = vmatprep.subr.bf16.mxu0 0
    %1150 = vmatpush1.bf16.msra.mxu0 0
    %1151 = vmatprep.subr.bf16.mxu0 0
    %1152 = vmatpush1.bf16.msra.mxu0 0
    %1153 = vmatprep.subr.bf16.mxu0 0
    %1154 = vmatpush1.bf16.msra.mxu0 0
    %1155 = vmatprep.subr.bf16.mxu0 0
    %1156 = vmatpush1.bf16.msra.mxu0 0
    %1157 = vmatprep.subr.bf16.mxu0 0
    %1158 = vmatpush1.bf16.msra.mxu0 0
    %1159 = vmatprep.subr.bf16.mxu0 0
    %1160 = vmatpush1.bf16.msra.mxu0 0
    %1161 = vmatprep.mubr.bf16.mxu0 0
    %1162 = vmatmul.mubr.bf16.gmra.mrb[0].mxu0 %v1123
    %v1163 = vpop.f32.mrb[0].mxu0
    %v1164 = vadd.f32 %v1125, %v1163
    %v1165 = vpop.f32.mrb[0].mxu0
    %v1166 = vadd.f32 %v1126, %v1165
    %v1167 = vpop.f32.mrb[0].mxu0
    %v1168 = vpop.f32.mrb[0].mxu0
    %1169 = vdwg.mxu0
    %1170 = vmatprep.subr.bf16.mxu0 %v473
    %1171 = vmatpush1.bf16.msra.mxu0 %v472
    %1172 = vmatprep.subr.bf16.mxu0 %v477
    %1173 = vmatpush1.bf16.msra.mxu0 %v476
    %1174 = vmatprep.subr.bf16.mxu0 %v481
    %1175 = vmatpush1.bf16.msra.mxu0 %v480
    %1176 = vmatprep.subr.bf16.mxu0 %v485
    %1177 = vmatpush1.bf16.msra.mxu0 %v484
    %1178 = vmatprep.subr.bf16.mxu0 %v489
    %1179 = vmatpush1.bf16.msra.mxu0 %v488
    %1180 = vmatprep.subr.bf16.mxu0 %v493
    %1181 = vmatpush1.bf16.msra.mxu0 %v492
    %1182 = vmatprep.subr.bf16.mxu0 %v497
    %1183 = vmatpush1.bf16.msra.mxu0 %v496
    %1184 = vmatprep.subr.bf16.mxu0 %v501
    %1185 = vmatpush1.bf16.msra.mxu0 %v500
    %1186 = vmatprep.subr.bf16.mxu0 0
    %1187 = vmatpush1.bf16.msra.mxu0 0
    %1188 = vmatprep.subr.bf16.mxu0 0
    %1189 = vmatpush1.bf16.msra.mxu0 0
    %1190 = vmatprep.subr.bf16.mxu0 0
    %1191 = vmatpush1.bf16.msra.mxu0 0
    %1192 = vmatprep.subr.bf16.mxu0 0
    %1193 = vmatpush1.bf16.msra.mxu0 0
    %1194 = vmatprep.subr.bf16.mxu0 0
    %1195 = vmatpush1.bf16.msra.mxu0 0
    %1196 = vmatprep.subr.bf16.mxu0 0
    %1197 = vmatpush1.bf16.msra.mxu0 0
    %1198 = vmatprep.subr.bf16.mxu0 0
    %1199 = vmatpush1.bf16.msra.mxu0 0
    %1200 = vmatprep.subr.bf16.mxu0 0
    %1201 = vmatpush1.bf16.msra.mxu0 0
    %1202 = vmatprep.mubr.bf16.mxu0 0
    %1203 = vmatmul.mubr.bf16.gmra.mrb[0].mxu0 %v1123
    %v1204 = vpop.f32.mrb[0].mxu0
    %v1205 = vadd.f32 %v1127, %v1204
    %v1206 = vpop.f32.mrb[0].mxu0
    %v1207 = vadd.f32 %v1128, %v1206
    %v1208 = vpop.f32.mrb[0].mxu0
    %v1209 = vpop.f32.mrb[0].mxu0
    %1210 = vdwg.mxu0
    %v1211 = vxor.u32 %v1164, 2147483648
    %v1212 = vxor.u32 %v1166, 2147483648
    %v1213 = vxor.u32 %v1205, 2147483648
    %v1214 = vxor.u32 %v1207, 2147483648
    %v1215 = vmul.f32 %v1211, 1.442695
    %v1216 = vpow.pop %v1215
    %v1217 = vmul.f32 %v1212, 1.442695
    %v1218 = vpow.pop %v1217
    %v1219 = vmul.f32 %v1213, 1.442695
    %v1220 = vpow.pop %v1219
    %v1221 = vmul.f32 %v1214, 1.442695
    %v1222 = vpow.pop %v1221
    %v1223 = vadd.f32 %v1216, 1.0
    %v1224 = vadd.f32 %v1218, 1.0
    %v1225 = vadd.f32 %v1220, 1.0
    %v1226 = vadd.f32 %v1222, 1.0
    %v1227 = vrcp.pop %v1223
    %v1228 = vmul.f32 1.0, %v1227
    %v1229 = vrcp.pop %v1224
    %v1230 = vmul.f32 1.0, %v1229
    %v1231 = vrcp.pop %v1225
    %v1232 = vmul.f32 1.0, %v1231
    %v1233 = vrcp.pop %v1226
    %v1234 = vmul.f32 1.0, %v1233
    %v1235 = vmul.f32 %v1232, 2.0
    %v1236 = vsub.f32 %v1235, 1.0
    %v1237 = vmul.f32 %v1230, %v1120
    %v1238 = vmul.f32 %v1228, %v1236
    %v1239 = vadd.f32 %v1237, %v1238
    %v1240 = vtanh.pop %v1239
    %v1241 = vmul.f32 %v1234, %v1240
    %v1242 = vpack.c.bf16 %v1241, %v1241
    %s1243 = scalar_lea.vmem [#allocation2], 192
    %v1244 = vld [vmem:[%s1243] sm:$0xff]
    %v1245 = vld [vmem:[%s1243 + $0x8] sm:$0xff]
    %v1246 = vld [vmem:[%s1243 + $0x10] sm:$0xff]
    %v1247 = vld [vmem:[%s1243 + $0x18] sm:$0xff]
    %1248 = vmatprep.subr.bf16.mxu0 %v471
    %1249 = vmatpush1.bf16.msra.mxu0 %v470
    %1250 = vmatprep.subr.bf16.mxu0 %v475
    %1251 = vmatpush1.bf16.msra.mxu0 %v474
    %1252 = vmatprep.subr.bf16.mxu0 %v479
    %1253 = vmatpush1.bf16.msra.mxu0 %v478
    %1254 = vmatprep.subr.bf16.mxu0 %v483
    %1255 = vmatpush1.bf16.msra.mxu0 %v482
    %1256 = vmatprep.subr.bf16.mxu0 %v487
    %1257 = vmatpush1.bf16.msra.mxu0 %v486
    %1258 = vmatprep.subr.bf16.mxu0 %v491
    %1259 = vmatpush1.bf16.msra.mxu0 %v490
    %1260 = vmatprep.subr.bf16.mxu0 %v495
    %1261 = vmatpush1.bf16.msra.mxu0 %v494
    %1262 = vmatprep.subr.bf16.mxu0 %v499
    %1263 = vmatpush1.bf16.msra.mxu0 %v498
    %1264 = vmatprep.subr.bf16.mxu0 0
    %1265 = vmatpush1.bf16.msra.mxu0 0
    %1266 = vmatprep.subr.bf16.mxu0 0
    %1267 = vmatpush1.bf16.msra.mxu0 0
    %1268 = vmatprep.subr.bf16.mxu0 0
    %1269 = vmatpush1.bf16.msra.mxu0 0
    %1270 = vmatprep.subr.bf16.mxu0 0
    %1271 = vmatpush1.bf16.msra.mxu0 0
    %1272 = vmatprep.subr.bf16.mxu0 0
    %1273 = vmatpush1.bf16.msra.mxu0 0
    %1274 = vmatprep.subr.bf16.mxu0 0
    %1275 = vmatpush1.bf16.msra.mxu0 0
    %1276 = vmatprep.subr.bf16.mxu0 0
    %1277 = vmatpush1.bf16.msra.mxu0 0
    %1278 = vmatprep.subr.bf16.mxu0 0
    %1279 = vmatpush1.bf16.msra.mxu0 0
    %1280 = vmatprep.mubr.bf16.mxu0 0
    %1281 = vmatmul.mubr.bf16.gmra.mrb[0].mxu0 %v1242
    %v1282 = vpop.f32.mrb[0].mxu0
    %v1283 = vadd.f32 %v1244, %v1282
    %v1284 = vpop.f32.mrb[0].mxu0
    %v1285 = vadd.f32 %v1245, %v1284
    %v1286 = vpop.f32.mrb[0].mxu0
    %v1287 = vpop.f32.mrb[0].mxu0
    %1288 = vdwg.mxu0
    %1289 = vmatprep.subr.bf16.mxu0 %v473
    %1290 = vmatpush1.bf16.msra.mxu0 %v472
    %1291 = vmatprep.subr.bf16.mxu0 %v477
    %1292 = vmatpush1.bf16.msra.mxu0 %v476
    %1293 = vmatprep.subr.bf16.mxu0 %v481
    %1294 = vmatpush1.bf16.msra.mxu0 %v480
    %1295 = vmatprep.subr.bf16.mxu0 %v485
    %1296 = vmatpush1.bf16.msra.mxu0 %v484
    %1297 = vmatprep.subr.bf16.mxu0 %v489
    %1298 = vmatpush1.bf16.msra.mxu0 %v488
    %1299 = vmatprep.subr.bf16.mxu0 %v493
    %1300 = vmatpush1.bf16.msra.mxu0 %v492
    %1301 = vmatprep.subr.bf16.mxu0 %v497
    %1302 = vmatpush1.bf16.msra.mxu0 %v496
    %1303 = vmatprep.subr.bf16.mxu0 %v501
    %1304 = vmatpush1.bf16.msra.mxu0 %v500
    %1305 = vmatprep.subr.bf16.mxu0 0
    %1306 = vmatpush1.bf16.msra.mxu0 0
    %1307 = vmatprep.subr.bf16.mxu0 0
    %1308 = vmatpush1.bf16.msra.mxu0 0
    %1309 = vmatprep.subr.bf16.mxu0 0
    %1310 = vmatpush1.bf16.msra.mxu0 0
    %1311 = vmatprep.subr.bf16.mxu0 0
    %1312 = vmatpush1.bf16.msra.mxu0 0
    %1313 = vmatprep.subr.bf16.mxu0 0
    %1314 = vmatpush1.bf16.msra.mxu0 0
    %1315 = vmatprep.subr.bf16.mxu0 0
    %1316 = vmatpush1.bf16.msra.mxu0 0
    %1317 = vmatprep.subr.bf16.mxu0 0
    %1318 = vmatpush1.bf16.msra.mxu0 0
    %1319 = vmatprep.subr.bf16.mxu0 0
    %1320 = vmatpush1.bf16.msra.mxu0 0
    %1321 = vmatprep.mubr.bf16.mxu0 0
    %1322 = vmatmul.mubr.bf16.gmra.mrb[0].mxu0 %v1242
    %v1323 = vpop.f32.mrb[0].mxu0
    %v1324 = vadd.f32 %v1246, %v1323
    %v1325 = vpop.f32.mrb[0].mxu0
    %v1326 = vadd.f32 %v1247, %v1325
    %v1327 = vpop.f32.mrb[0].mxu0
    %v1328 = vpop.f32.mrb[0].mxu0
    %1329 = vdwg.mxu0
    %v1330 = vxor.u32 %v1283, 2147483648
    %v1331 = vxor.u32 %v1285, 2147483648
    %v1332 = vxor.u32 %v1324, 2147483648
    %v1333 = vxor.u32 %v1326, 2147483648
    %v1334 = vmul.f32 %v1330, 1.442695
    %v1335 = vpow.pop %v1334
    %v1336 = vmul.f32 %v1331, 1.442695
    %v1337 = vpow.pop %v1336
    %v1338 = vmul.f32 %v1332, 1.442695
    %v1339 = vpow.pop %v1338
    %v1340 = vmul.f32 %v1333, 1.442695
    %v1341 = vpow.pop %v1340
    %v1342 = vadd.f32 %v1335, 1.0
    %v1343 = vadd.f32 %v1337, 1.0
    %v1344 = vadd.f32 %v1339, 1.0
    %v1345 = vadd.f32 %v1341, 1.0
    %v1346 = vrcp.pop %v1342
    %v1347 = vmul.f32 1.0, %v1346
    %v1348 = vrcp.pop %v1343
    %v1349 = vmul.f32 1.0, %v1348
    %v1350 = vrcp.pop %v1344
    %v1351 = vmul.f32 1.0, %v1350
    %v1352 = vrcp.pop %v1345
    %v1353 = vmul.f32 1.0, %v1352
    %v1354 = vmul.f32 %v1351, 2.0
    %v1355 = vsub.f32 %v1354, 1.0
    %v1356 = vmul.f32 %v1349, %v1239
    %v1357 = vmul.f32 %v1347, %v1355
    %v1358 = vadd.f32 %v1356, %v1357
    %v1359 = vtanh.pop %v1358
    %v1360 = vmul.f32 %v1353, %v1359
    %v1361 = vpack.c.bf16 %v1360, %v1360
    %s1362 = scalar_lea.vmem [#allocation2], 224
    %v1363 = vld [vmem:[%s1362] sm:$0xff]
    %v1364 = vld [vmem:[%s1362 + $0x8] sm:$0xff]
    %v1365 = vld [vmem:[%s1362 + $0x10] sm:$0xff]
    %v1366 = vld [vmem:[%s1362 + $0x18] sm:$0xff]
    %1367 = vmatprep.subr.bf16.mxu0 %v471
    %1368 = vmatpush1.bf16.msra.mxu0 %v470
    %1369 = vmatprep.subr.bf16.mxu0 %v475
    %1370 = vmatpush1.bf16.msra.mxu0 %v474
    %1371 = vmatprep.subr.bf16.mxu0 %v479
    %1372 = vmatpush1.bf16.msra.mxu0 %v478
    %1373 = vmatprep.subr.bf16.mxu0 %v483
    %1374 = vmatpush1.bf16.msra.mxu0 %v482
    %1375 = vmatprep.subr.bf16.mxu0 %v487
    %1376 = vmatpush1.bf16.msra.mxu0 %v486
    %1377 = vmatprep.subr.bf16.mxu0 %v491
    %1378 = vmatpush1.bf16.msra.mxu0 %v490
    %1379 = vmatprep.subr.bf16.mxu0 %v495
    %1380 = vmatpush1.bf16.msra.mxu0 %v494
    %1381 = vmatprep.subr.bf16.mxu0 %v499
    %1382 = vmatpush1.bf16.msra.mxu0 %v498
    %1383 = vmatprep.subr.bf16.mxu0 0
    %1384 = vmatpush1.bf16.msra.mxu0 0
    %1385 = vmatprep.subr.bf16.mxu0 0
    %1386 = vmatpush1.bf16.msra.mxu0 0
    %1387 = vmatprep.subr.bf16.mxu0 0
    %1388 = vmatpush1.bf16.msra.mxu0 0
    %1389 = vmatprep.subr.bf16.mxu0 0
    %1390 = vmatpush1.bf16.msra.mxu0 0
    %1391 = vmatprep.subr.bf16.mxu0 0
    %1392 = vmatpush1.bf16.msra.mxu0 0
    %1393 = vmatprep.subr.bf16.mxu0 0
    %1394 = vmatpush1.bf16.msra.mxu0 0
    %1395 = vmatprep.subr.bf16.mxu0 0
    %1396 = vmatpush1.bf16.msra.mxu0 0
    %1397 = vmatprep.subr.bf16.mxu0 0
    %1398 = vmatpush1.bf16.msra.mxu0 0
    %1399 = vmatprep.mubr.bf16.mxu0 0
    %1400 = vmatmul.mubr.bf16.gmra.mrb[0].mxu0 %v1361
    %v1401 = vpop.f32.mrb[0].mxu0
    %v1402 = vadd.f32 %v1363, %v1401
    %v1403 = vpop.f32.mrb[0].mxu0
    %v1404 = vadd.f32 %v1364, %v1403
    %v1405 = vpop.f32.mrb[0].mxu0
    %v1406 = vpop.f32.mrb[0].mxu0
    %1407 = vdwg.mxu0
    %1408 = vmatprep.subr.bf16.mxu0 %v473
    %1409 = vmatpush1.bf16.msra.mxu0 %v472
    %1410 = vmatprep.subr.bf16.mxu0 %v477
    %1411 = vmatpush1.bf16.msra.mxu0 %v476
    %1412 = vmatprep.subr.bf16.mxu0 %v481
    %1413 = vmatpush1.bf16.msra.mxu0 %v480
    %1414 = vmatprep.subr.bf16.mxu0 %v485
    %1415 = vmatpush1.bf16.msra.mxu0 %v484
    %1416 = vmatprep.subr.bf16.mxu0 %v489
    %1417 = vmatpush1.bf16.msra.mxu0 %v488
    %1418 = vmatprep.subr.bf16.mxu0 %v493
    %1419 = vmatpush1.bf16.msra.mxu0 %v492
    %1420 = vmatprep.subr.bf16.mxu0 %v497
    %1421 = vmatpush1.bf16.msra.mxu0 %v496
    %1422 = vmatprep.subr.bf16.mxu0 %v501
    %1423 = vmatpush1.bf16.msra.mxu0 %v500
    %1424 = vmatprep.subr.bf16.mxu0 0
    %1425 = vmatpush1.bf16.msra.mxu0 0
    %1426 = vmatprep.subr.bf16.mxu0 0
    %1427 = vmatpush1.bf16.msra.mxu0 0
    %1428 = vmatprep.subr.bf16.mxu0 0
    %1429 = vmatpush1.bf16.msra.mxu0 0
    %1430 = vmatprep.subr.bf16.mxu0 0
    %1431 = vmatpush1.bf16.msra.mxu0 0
    %1432 = vmatprep.subr.bf16.mxu0 0
    %1433 = vmatpush1.bf16.msra.mxu0 0
    %1434 = vmatprep.subr.bf16.mxu0 0
    %1435 = vmatpush1.bf16.msra.mxu0 0
    %1436 = vmatprep.subr.bf16.mxu0 0
    %1437 = vmatpush1.bf16.msra.mxu0 0
    %1438 = vmatprep.subr.bf16.mxu0 0
    %1439 = vmatpush1.bf16.msra.mxu0 0
    %1440 = vmatprep.mubr.bf16.mxu0 0
    %1441 = vmatmul.mubr.bf16.gmra.mrb[0].mxu0 %v1361
    %v1442 = vpop.f32.mrb[0].mxu0
    %v1443 = vadd.f32 %v1365, %v1442
    %v1444 = vpop.f32.mrb[0].mxu0
    %v1445 = vadd.f32 %v1366, %v1444
    %v1446 = vpop.f32.mrb[0].mxu0
    %v1447 = vpop.f32.mrb[0].mxu0
    %1448 = vdwg.mxu0
    %v1449 = vxor.u32 %v1402, 2147483648
    %v1450 = vxor.u32 %v1404, 2147483648
    %v1451 = vxor.u32 %v1443, 2147483648
    %v1452 = vxor.u32 %v1445, 2147483648
    %v1453 = vmul.f32 %v1449, 1.442695
    %v1454 = vpow.pop %v1453
    %v1455 = vmul.f32 %v1450, 1.442695
    %v1456 = vpow.pop %v1455
    %v1457 = vmul.f32 %v1451, 1.442695
    %v1458 = vpow.pop %v1457
    %v1459 = vmul.f32 %v1452, 1.442695
    %v1460 = vpow.pop %v1459
    %v1461 = vadd.f32 %v1454, 1.0
    %v1462 = vadd.f32 %v1456, 1.0
    %v1463 = vadd.f32 %v1458, 1.0
    %v1464 = vadd.f32 %v1460, 1.0
    %v1465 = vrcp.pop %v1461
    %v1466 = vmul.f32 1.0, %v1465
    %v1467 = vrcp.pop %v1462
    %v1468 = vmul.f32 1.0, %v1467
    %v1469 = vrcp.pop %v1463
    %v1470 = vmul.f32 1.0, %v1469
    %v1471 = vrcp.pop %v1464
    %v1472 = vmul.f32 1.0, %v1471
    %v1473 = vmul.f32 %v1470, 2.0
    %v1474 = vsub.f32 %v1473, 1.0
    %v1475 = vmul.f32 %v1468, %v1358
    %v1476 = vmul.f32 %v1466, %v1474
    %v1477 = vadd.f32 %v1475, %v1476
    %v1478 = vtanh.pop %v1477
    %v1479 = vmul.f32 %v1472, %v1478
    %v1480 = vld [vmem:[%s3 + $0x4] sm:$0x1]
    %v1481 = vld [vmem:[%s3 + $0x5] sm:$0x1]
    %v1482 = vpack.c.bf16 %v1479, %v1479
    %v1483 = vld [vmem:[#allocation5] sm:$0xf]
    %v1484 = vld [vmem:[#allocation5 + $0x8] sm:$0xf]
    %v1485 = vld [vmem:[#allocation5 + $0x10] sm:$0xf]
    %v1486 = vld [vmem:[#allocation5 + $0x18] sm:$0xf]
    %v1487 = vld [vmem:[#allocation5 + $0x20] sm:$0xf]
    %v1488 = vld [vmem:[#allocation5 + $0x28] sm:$0xf]
    %v1489 = vld [vmem:[#allocation5 + $0x30] sm:$0xf]
    %v1490 = vld [vmem:[#allocation5 + $0x38] sm:$0xf]
    %v1491 = vld [vmem:[#allocation5 + $0x40] sm:$0xf]
    %v1492 = vld [vmem:[#allocation5 + $0x48] sm:$0xf]
    %v1493 = vld [vmem:[#allocation5 + $0x50] sm:$0xf]
    %v1494 = vld [vmem:[#allocation5 + $0x58] sm:$0xf]
    %v1495 = vld [vmem:[#allocation5 + $0x60] sm:$0xf]
    %v1496 = vld [vmem:[#allocation5 + $0x68] sm:$0xf]
    %v1497 = vld [vmem:[#allocation5 + $0x70] sm:$0xf]
    %v1498 = vld [vmem:[#allocation5 + $0x78] sm:$0xf]
    %v1500 = vlaneseq
    %v1501 = vshrl.u32 %v1500, 7
    %v1502 = vsub.s32 0, %v1501
    %v1503 = vrot.slane %v1480, %v1502
    %v1521 = vunpack.c.l.b16 %v1483
    %v1522 = vunpack.c.l.b16 %v1484
    %v1523 = vunpack.c.l.b16 %v1485
    %v1524 = vunpack.c.l.b16 %v1486
    %v1525 = vunpack.c.l.b16 %v1487
    %v1526 = vunpack.c.l.b16 %v1488
    %v1527 = vunpack.c.l.b16 %v1489
    %v1528 = vunpack.c.l.b16 %v1490
    %v1529 = vunpack.c.l.b16 %v1491
    %v1530 = vunpack.c.l.b16 %v1492
    %v1531 = vunpack.c.l.b16 %v1493
    %v1532 = vunpack.c.l.b16 %v1494
    %v1533 = vunpack.c.l.b16 %v1495
    %v1534 = vunpack.c.l.b16 %v1496
    %v1535 = vunpack.c.l.b16 %v1497
    %v1536 = vunpack.c.l.b16 %v1498
    %v1537 = vpack.c.b16 %v1522, %v1521
    %v1538 = vpack.c.b16 %v1524, %v1523
    %v1539 = vpack.c.b16 %v1526, %v1525
    %v1540 = vpack.c.b16 %v1528, %v1527
    %v1541 = vpack.c.b16 %v1530, %v1529
    %v1542 = vpack.c.b16 %v1532, %v1531
    %v1543 = vpack.c.b16 %v1534, %v1533
    %v1544 = vpack.c.b16 %v1536, %v1535
    %1553 = vmatprep.subr.bf16.mxu0 0
    %1554 = vmatpush1.bf16.msra.mxu0 %v1537
    %1555 = vmatprep.subr.bf16.mxu0 0
    %1556 = vmatpush1.bf16.msra.mxu0 %v1538
    %1557 = vmatprep.subr.bf16.mxu0 0
    %1558 = vmatpush1.bf16.msra.mxu0 %v1539
    %1559 = vmatprep.subr.bf16.mxu0 0
    %1560 = vmatpush1.bf16.msra.mxu0 %v1540
    %1561 = vmatprep.subr.bf16.mxu0 0
    %1562 = vmatpush1.bf16.msra.mxu0 %v1541
    %1563 = vmatprep.subr.bf16.mxu0 0
    %1564 = vmatpush1.bf16.msra.mxu0 %v1542
    %1565 = vmatprep.subr.bf16.mxu0 0
    %1566 = vmatpush1.bf16.msra.mxu0 %v1543
    %1567 = vmatprep.subr.bf16.mxu0 0
    %1568 = vmatpush1.bf16.msra.mxu0 %v1544
    %1569 = vmatprep.subr.bf16.mxu0 0
    %1570 = vmatpush1.bf16.msra.mxu0 0
    %1571 = vmatprep.subr.bf16.mxu0 0
    %1572 = vmatpush1.bf16.msra.mxu0 0
    %1573 = vmatprep.subr.bf16.mxu0 0
    %1574 = vmatpush1.bf16.msra.mxu0 0
    %1575 = vmatprep.subr.bf16.mxu0 0
    %1576 = vmatpush1.bf16.msra.mxu0 0
    %1577 = vmatprep.subr.bf16.mxu0 0
    %1578 = vmatpush1.bf16.msra.mxu0 0
    %1579 = vmatprep.subr.bf16.mxu0 0
    %1580 = vmatpush1.bf16.msra.mxu0 0
    %1581 = vmatprep.subr.bf16.mxu0 0
    %1582 = vmatpush1.bf16.msra.mxu0 0
    %1583 = vmatprep.subr.bf16.mxu0 0
    %1584 = vmatpush1.bf16.msra.mxu0 0
    %1585 = vmatprep.mubr.bf16.mxu0 0
    %1586 = vmatmul.mubr.bf16.gmra.mrb[0].mxu0 %v1482
    %v1587 = vpop.f32.mrb[0].mxu0
    %v1588 = vadd.f32 %v1503, %v1587
    %v1589 = vpop.f32.mrb[0].mxu0
    %v1590 = vpop.f32.mrb[0].mxu0
    %v1591 = vpop.f32.mrb[0].mxu0
    %1592 = vdwg.mxu0
    %v1593 = vmax.f32 %v1588, 0.0
    %v1594 = vpack.c.bf16 %v1593, %v1593
    %v1595 = vld [vmem:[#allocation5 + $0x4] sm:$0xf]
    %v1596 = vld [vmem:[#allocation5 + $0xc] sm:$0xf]
    %v1597 = vld [vmem:[#allocation5 + $0x14] sm:$0xf]
    %v1598 = vld [vmem:[#allocation5 + $0x1c] sm:$0xf]
    %v1599 = vld [vmem:[#allocation5 + $0x24] sm:$0xf]
    %v1600 = vld [vmem:[#allocation5 + $0x2c] sm:$0xf]
    %v1601 = vld [vmem:[#allocation5 + $0x34] sm:$0xf]
    %v1602 = vld [vmem:[#allocation5 + $0x3c] sm:$0xf]
    %v1603 = vld [vmem:[#allocation5 + $0x44] sm:$0xf]
    %v1604 = vld [vmem:[#allocation5 + $0x4c] sm:$0xf]
    %v1605 = vld [vmem:[#allocation5 + $0x54] sm:$0xf]
    %v1606 = vld [vmem:[#allocation5 + $0x5c] sm:$0xf]
    %v1607 = vld [vmem:[#allocation5 + $0x64] sm:$0xf]
    %v1608 = vld [vmem:[#allocation5 + $0x6c] sm:$0xf]
    %v1609 = vld [vmem:[#allocation5 + $0x74] sm:$0xf]
    %v1610 = vld [vmem:[#allocation5 + $0x7c] sm:$0xf]
    %v1612 = vlaneseq
    %v1613 = vshrl.u32 %v1612, 7
    %v1614 = vsub.s32 0, %v1613
    %v1615 = vrot.slane %v1481, %v1614
    %v1633 = vunpack.c.l.b16 %v1595
    %v1634 = vunpack.c.l.b16 %v1596
    %v1635 = vunpack.c.l.b16 %v1597
    %v1636 = vunpack.c.l.b16 %v1598
    %v1637 = vunpack.c.l.b16 %v1599
    %v1638 = vunpack.c.l.b16 %v1600
    %v1639 = vunpack.c.l.b16 %v1601
    %v1640 = vunpack.c.l.b16 %v1602
    %v1641 = vunpack.c.l.b16 %v1603
    %v1642 = vunpack.c.l.b16 %v1604
    %v1643 = vunpack.c.l.b16 %v1605
    %v1644 = vunpack.c.l.b16 %v1606
    %v1645 = vunpack.c.l.b16 %v1607
    %v1646 = vunpack.c.l.b16 %v1608
    %v1647 = vunpack.c.l.b16 %v1609
    %v1648 = vunpack.c.l.b16 %v1610
    %v1649 = vpack.c.b16 %v1634, %v1633
    %v1650 = vpack.c.b16 %v1636, %v1635
    %v1651 = vpack.c.b16 %v1638, %v1637
    %v1652 = vpack.c.b16 %v1640, %v1639
    %v1653 = vpack.c.b16 %v1642, %v1641
    %v1654 = vpack.c.b16 %v1644, %v1643
    %v1655 = vpack.c.b16 %v1646, %v1645
    %v1656 = vpack.c.b16 %v1648, %v1647
    %1665 = vmatprep.subr.bf16.mxu0 0
    %1666 = vmatpush1.bf16.msra.mxu0 %v1649
    %1667 = vmatprep.subr.bf16.mxu0 0
    %1668 = vmatpush1.bf16.msra.mxu0 %v1650
    %1669 = vmatprep.subr.bf16.mxu0 0
    %1670 = vmatpush1.bf16.msra.mxu0 %v1651
    %1671 = vmatprep.subr.bf16.mxu0 0
    %1672 = vmatpush1.bf16.msra.mxu0 %v1652
    %1673 = vmatprep.subr.bf16.mxu0 0
    %1674 = vmatpush1.bf16.msra.mxu0 %v1653
    %1675 = vmatprep.subr.bf16.mxu0 0
    %1676 = vmatpush1.bf16.msra.mxu0 %v1654
    %1677 = vmatprep.subr.bf16.mxu0 0
    %1678 = vmatpush1.bf16.msra.mxu0 %v1655
    %1679 = vmatprep.subr.bf16.mxu0 0
    %1680 = vmatpush1.bf16.msra.mxu0 %v1656
    %1681 = vmatprep.subr.bf16.mxu0 0
    %1682 = vmatpush1.bf16.msra.mxu0 0
    %1683 = vmatprep.subr.bf16.mxu0 0
    %1684 = vmatpush1.bf16.msra.mxu0 0
    %1685 = vmatprep.subr.bf16.mxu0 0
    %1686 = vmatpush1.bf16.msra.mxu0 0
    %1687 = vmatprep.subr.bf16.mxu0 0
    %1688 = vmatpush1.bf16.msra.mxu0 0
    %1689 = vmatprep.subr.bf16.mxu0 0
    %1690 = vmatpush1.bf16.msra.mxu0 0
    %1691 = vmatprep.subr.bf16.mxu0 0
    %1692 = vmatpush1.bf16.msra.mxu0 0
    %1693 = vmatprep.subr.bf16.mxu0 0
    %1694 = vmatpush1.bf16.msra.mxu0 0
    %1695 = vmatprep.subr.bf16.mxu0 0
    %1696 = vmatpush1.bf16.msra.mxu0 0
    %1697 = vmatprep.mubr.bf16.mxu0 0
    %1698 = vmatmul.mubr.bf16.gmra.mrb[0].mxu0 %v1594
    %v1699 = vpop.f32.mrb[0].mxu0
    %v1700 = vadd.f32 %v1615, %v1699
    %v1701 = vpop.f32.mrb[0].mxu0
    %v1702 = vpop.f32.mrb[0].mxu0
    %v1703 = vpop.f32.mrb[0].mxu0
    %1704 = vdwg.mxu0
    %1705 = vst [vmem:[%s5] sm:$0xff] %v1700
    // Predicated region
    $region30: #{expense_classifier_forward.1} parent=1 // pred_check
      _
    $region31: #{expense_classifier_forward.1} parent=1 // pred_check_branch
      %1707 = sbr.rel (0) target = $region33
    $region32: #{expense_classifier_forward.1} parent=1 // pred_region
      _
    $region33: #{expense_classifier_forward.1} parent=1 // pred_fallthru
      _
    // Predicated region
    $region34: #{expense_classifier_forward.1} parent=1 // pred_check
      _
    $region35: #{expense_classifier_forward.1} parent=1 // pred_check_branch
      %1709 = sbr.rel (0) target = $region37
    $region36: #{expense_classifier_forward.1} parent=1 // pred_region
      _
    $region37: #{expense_classifier_forward.1} parent=1 // pred_fallthru
      _
    %1710 = vsyncpa [#allocation4], 1
    %1711 = vsyncpa [#allocation6], 1

</llo_original>
